<compile_context>
chip_gen: v7x
topology: tpu7x:2x2x1
jax: 0.10.0
libtpu: 0.0.40
codegen_flags: <defaults>
</compile_context>

<pallas_src>
import functools

import jax
import jax.numpy as jnp
from jax.experimental import pallas as pl
from jax.experimental.pallas import tpu as pltpu

IN_FEATURES = 28 * 28       # 784
NUM_CLASSES = 10
OUT_PAD = 128               # lane-dense padded class dimension


def _round_up(x, m):
    return ((x + m - 1) // m) * m


def mnist_flat_kernel(x_ref, w1_ref, b1_ref, w2_ref, b2_ref, w3_ref, b3_ref,
                      o_ref):
    # fc1 + ReLU  (bf16 MXU inputs, f32 accumulation / elementwise)
    x = x_ref[...].astype(jnp.bfloat16)
    h1 = jnp.dot(x, w1_ref[...], preferred_element_type=jnp.float32)
    h1 = jnp.maximum(h1 + b1_ref[...], 0.0)

    # fc2 + ReLU
    h2 = jnp.dot(h1.astype(jnp.bfloat16), w2_ref[...],
                 preferred_element_type=jnp.float32)
    h2 = jnp.maximum(h2 + b2_ref[...], 0.0)

    # fc3 (class dim padded to OUT_PAD lanes -> lane-dense store)
    logits = jnp.dot(h2.astype(jnp.bfloat16), w3_ref[...],
                     preferred_element_type=jnp.float32)
    logits = logits + b3_ref[...]

    # Mask the padded class lanes so softmax over all OUT_PAD lanes equals
    # softmax over the real 10 classes (padded lanes get ~0 probability).
    lane = jax.lax.broadcasted_iota(jnp.int32, logits.shape, 1)
    logits = jnp.where(lane < NUM_CLASSES, logits, -1e30)

    # softmax over class axis (== nn.Softmax(dim=1) on the [B, 10] output)
    m = jnp.max(logits, axis=-1, keepdims=True)
    e = jnp.exp(logits - m)
    o_ref[...] = e / jnp.sum(e, axis=-1, keepdims=True)


@functools.partial(jax.jit, static_argnames=("block_batch",))
def mnist_flat_forward(x_nchw, params, *, block_batch=256):
    """x_nchw: [B, 1, 28, 28] float32.  Returns softmax probs [B, 10]."""
    w1, b1, w2, b2, w3, b3 = params
    H1 = w1.shape[1]
    H2 = w2.shape[1]

    B = x_nchw.shape[0]
    x_flat = x_nchw.reshape(B, IN_FEATURES)          # x.view(-1, 784)
    if x_flat.dtype != jnp.float32:
        x_flat = x_flat.astype(jnp.float32)

    # Batch tile: multiple of 8 (f32 sublane); <=block_batch (MXU M dim /
    # VMEM headroom, safe for v7x's smaller VMEM).
    TB = min(block_batch, _round_up(B, 8))
    Bp = _round_up(B, TB)
    if Bp != B:
        x_flat = jnp.pad(x_flat, ((0, Bp - B), (0, 0)))

    # bf16 weights (halves dominant HBM bytes); biases stay f32 (tiny, and
    # all elementwise work is f32 for v5e's VPU).
    w1_b = w1.astype(jnp.bfloat16)
    w2_b = w2.astype(jnp.bfloat16)
    # Pad fc3 to OUT_PAD output features so the output store is lane-dense.
    w3_p = jnp.pad(w3, ((0, 0), (0, OUT_PAD - NUM_CLASSES))).astype(jnp.bfloat16)
    b3_p = jnp.pad(b3, ((0, 0), (0, OUT_PAD - NUM_CLASSES)))

    flops = 2 * Bp * (IN_FEATURES * H1 + H1 * H2 + H2 * OUT_PAD)
    bytes_accessed = (
        x_flat.size * 4 + Bp * OUT_PAD * 4            # activations in/out
        + w1_b.size * 2 + w2_b.size * 2 + w3_p.size * 2
        + b1.size * 4 + b2.size * 4 + b3_p.size * 4)

    resident = lambda shape: pl.BlockSpec(shape, lambda i: (0, 0))
    out = pl.pallas_call(
        mnist_flat_kernel,
        out_shape=jax.ShapeDtypeStruct((Bp, OUT_PAD), jnp.float32),
        grid=(Bp // TB,),
        in_specs=[
            pl.BlockSpec((TB, IN_FEATURES), lambda i: (i, 0)),  # x tile
            resident((IN_FEATURES, H1)), resident((1, H1)),     # fc1
            resident((H1, H2)), resident((1, H2)),              # fc2
            resident((H2, OUT_PAD)), resident((1, OUT_PAD)),    # fc3 (padded)
        ],
        out_specs=pl.BlockSpec((TB, OUT_PAD), lambda i: (i, 0)),
        compiler_params=pltpu.CompilerParams(
            dimension_semantics=("parallel",)),
        cost_estimate=pl.CostEstimate(
            flops=flops,
            transcendentals=Bp * OUT_PAD,
            bytes_accessed=bytes_accessed),
    )(x_flat, w1_b, b1, w2_b, b2, w3_p, b3_p)

    # Drop batch padding and the padded class lanes.
    return out[:B, :NUM_CLASSES]


def init_params(key, n_hidden_1=512, n_hidden_2=128):
    """Deterministic init mimicking nn.Linear: U(-1/sqrt(fan_in), 1/sqrt(fan_in)).
    Weights stored as [in, out]; biases as [1, out] (2-D for TPU layout)."""
    dims = [(IN_FEATURES, n_hidden_1), (n_hidden_1, n_hidden_2),
            (n_hidden_2, NUM_CLASSES)]
    params = []
    for (fan_in, fan_out) in dims:
        key, kw, kb = jax.random.split(key, 3)
        bound = 1.0 / jnp.sqrt(float(fan_in))
        w = jax.random.uniform(kw, (fan_in, fan_out), jnp.float32, -bound, bound)
        b = jax.random.uniform(kb, (1, fan_out), jnp.float32, -bound, bound)
        params += [w, b]
    return tuple(params)


if __name__ == "__main__":
    key = jax.random.PRNGKey(0)
    key, kx = jax.random.split(key)
    # Small MNIST-like batch: [B, C, H, W] = [8, 1, 28, 28]
    x = jax.random.normal(kx, (8, 1, 28, 28), dtype=jnp.float32)
    params = init_params(key)

    probs = mnist_flat_forward(x, params)
    probs = jax.block_until_ready(probs)

    # Sanity check against a pure-JAX f32 reference (kernel uses bf16 weights,
    # so tolerance is relaxed accordingly).
    w1, b1, w2, b2, w3, b3 = params
    xf = x.reshape(8, IN_FEATURES)
    ref = jnp.maximum(xf @ w1 + b1, 0.0)
    ref = jnp.maximum(ref @ w2 + b2, 0.0)
    ref = ref @ w3 + b3
    ref = jax.nn.softmax(ref, axis=1)

    assert probs.shape == (8, NUM_CLASSES)
    assert jnp.allclose(jnp.sum(probs, axis=1), 1.0, atol=1e-4)
    assert jnp.allclose(probs, ref, atol=2e-2, rtol=2e-2)

    print("KERNEL_OK")
</pallas_src>

<mosaic_0001>
module attributes {stable_mosaic.version = 11 : i64} {
  func.func @mnist_flat_kernel(%arg0: i32, %arg1: memref<8x784xf32, #tpu.memory_space<vmem>>, %arg2: memref<784x512xbf16, #tpu.memory_space<vmem>>, %arg3: memref<1x512xf32, #tpu.memory_space<vmem>>, %arg4: memref<512x128xbf16, #tpu.memory_space<vmem>>, %arg5: memref<1x128xf32, #tpu.memory_space<vmem>>, %arg6: memref<128x128xbf16, #tpu.memory_space<vmem>>, %arg7: memref<1x128xf32, #tpu.memory_space<vmem>>, %arg8: memref<8x128xf32, #tpu.memory_space<vmem>>) attributes {dimension_semantics = [#tpu.dimension_semantics<parallel>], iteration_bounds = array<i64: 1>, scalar_prefetch = 0 : i64, scratch_operands = 0 : i64, tpu.core_type = #tpu.core_type<tc>, window_params = [{transform_indices = @transform_0, window_bounds = array<i64: 8, 784>}, {pipeline_mode = #tpu.pipeline_mode<synchronous>, transform_indices = @transform_1, window_bounds = array<i64: 784, 512>}, {pipeline_mode = #tpu.pipeline_mode<synchronous>, transform_indices = @transform_2, window_bounds = array<i64: 1, 512>}, {pipeline_mode = #tpu.pipeline_mode<synchronous>, transform_indices = @transform_3, window_bounds = array<i64: 512, 128>}, {pipeline_mode = #tpu.pipeline_mode<synchronous>, transform_indices = @transform_4, window_bounds = array<i64: 1, 128>}, {pipeline_mode = #tpu.pipeline_mode<synchronous>, transform_indices = @transform_5, window_bounds = array<i64: 128, 128>}, {pipeline_mode = #tpu.pipeline_mode<synchronous>, transform_indices = @transform_6, window_bounds = array<i64: 1, 128>}, {transform_indices = @transform_7, window_bounds = array<i64: 8, 128>}]} {
    %c0 = arith.constant 0 : index
    %c0_0 = arith.constant 0 : index
    %0 = vector.load %arg1[%c0, %c0_0] : memref<8x784xf32, #tpu.memory_space<vmem>>, vector<8x784xf32>
    %1 = arith.truncf %0 : vector<8x784xf32> to vector<8x784xbf16>
    %c0_1 = arith.constant 0 : index
    %c0_2 = arith.constant 0 : index
    %2 = vector.load %arg2[%c0_1, %c0_2] : memref<784x512xbf16, #tpu.memory_space<vmem>>, vector<784x512xbf16>
    %cst = arith.constant dense<0.000000e+00> : vector<8x512xf32>
    %3 = tpu.matmul %1, %2, %cst {dimension_numbers = #tpu.dot_dimension_numbers<[1], [0], [0], [1], [0, 0, 1, 1], [], []>} : vector<8x784xbf16>, vector<784x512xbf16>, vector<8x512xf32> -> vector<8x512xf32>
    %c0_3 = arith.constant 0 : index
    %c0_4 = arith.constant 0 : index
    %4 = vector.load %arg3[%c0_3, %c0_4] : memref<1x512xf32, #tpu.memory_space<vmem>>, vector<1x512xf32>
    %5 = vector.broadcast %4 : vector<1x512xf32> to vector<8x512xf32>
    %6 = arith.addf %3, %5 : vector<8x512xf32>
    %cst_5 = arith.constant 0.000000e+00 : f32
    %7 = vector.broadcast %cst_5 : f32 to vector<8x512xf32>
    %8 = arith.maximumf %6, %7 : vector<8x512xf32>
    %9 = arith.truncf %8 : vector<8x512xf32> to vector<8x512xbf16>
    %c0_6 = arith.constant 0 : index
    %c0_7 = arith.constant 0 : index
    %10 = vector.load %arg4[%c0_6, %c0_7] : memref<512x128xbf16, #tpu.memory_space<vmem>>, vector<512x128xbf16>
    %cst_8 = arith.constant dense<0.000000e+00> : vector<8x128xf32>
    %11 = tpu.matmul %9, %10, %cst_8 {dimension_numbers = #tpu.dot_dimension_numbers<[1], [0], [0], [1], [0, 0, 1, 1], [], []>} : vector<8x512xbf16>, vector<512x128xbf16>, vector<8x128xf32> -> vector<8x128xf32>
    %c0_9 = arith.constant 0 : index
    %c0_10 = arith.constant 0 : index
    %12 = vector.load %arg5[%c0_9, %c0_10] : memref<1x128xf32, #tpu.memory_space<vmem>>, vector<1x128xf32>
    %13 = vector.broadcast %12 : vector<1x128xf32> to vector<8x128xf32>
    %14 = arith.addf %11, %13 : vector<8x128xf32>
    %cst_11 = arith.constant 0.000000e+00 : f32
    %15 = vector.broadcast %cst_11 : f32 to vector<8x128xf32>
    %16 = arith.maximumf %14, %15 : vector<8x128xf32>
    %17 = arith.truncf %16 : vector<8x128xf32> to vector<8x128xbf16>
    %c0_12 = arith.constant 0 : index
    %c0_13 = arith.constant 0 : index
    %18 = vector.load %arg6[%c0_12, %c0_13] : memref<128x128xbf16, #tpu.memory_space<vmem>>, vector<128x128xbf16>
    %cst_14 = arith.constant dense<0.000000e+00> : vector<8x128xf32>
    %19 = tpu.matmul %17, %18, %cst_14 {dimension_numbers = #tpu.dot_dimension_numbers<[1], [0], [0], [1], [0, 0, 1, 1], [], []>} : vector<8x128xbf16>, vector<128x128xbf16>, vector<8x128xf32> -> vector<8x128xf32>
    %c0_15 = arith.constant 0 : index
    %c0_16 = arith.constant 0 : index
    %20 = vector.load %arg7[%c0_15, %c0_16] : memref<1x128xf32, #tpu.memory_space<vmem>>, vector<1x128xf32>
    %21 = vector.broadcast %20 : vector<1x128xf32> to vector<8x128xf32>
    %22 = arith.addf %19, %21 : vector<8x128xf32>
    %23 = tpu.iota {dimensions = array<i32: 1>} : vector<8x128xi32>
    %c10_i32 = arith.constant 10 : i32
    %24 = vector.broadcast %c10_i32 : i32 to vector<8x128xi32>
    %25 = arith.cmpi slt, %23, %24 : vector<8x128xi32>
    %cst_17 = arith.constant -1.000000e+30 : f32
    %26 = vector.broadcast %cst_17 : f32 to vector<8x128xf32>
    %27 = arith.select %25, %22, %26 : vector<8x128xi1>, vector<8x128xf32>
    %cst_18 = arith.constant dense<0xFF800000> : vector<8xf32>
    %28 = vector.multi_reduction <maximumf>, %27, %cst_18 [1] : vector<8x128xf32> to vector<8xf32>
    %29 = vector.shape_cast %28 : vector<8xf32> to vector<8x1xf32>
    %30 = vector.broadcast %29 : vector<8x1xf32> to vector<8x128xf32>
    %31 = arith.subf %27, %30 : vector<8x128xf32>
    %32 = math.exp %31 : vector<8x128xf32>
    %cst_19 = arith.constant dense<0.000000e+00> : vector<8xf32>
    %33 = vector.multi_reduction <add>, %32, %cst_19 [1] : vector<8x128xf32> to vector<8xf32>
    %34 = vector.shape_cast %33 : vector<8xf32> to vector<8x1xf32>
    %35 = vector.broadcast %34 : vector<8x1xf32> to vector<8x128xf32>
    %36 = arith.divf %32, %35 : vector<8x128xf32>
    %c0_20 = arith.constant 0 : index
    %c0_21 = arith.constant 0 : index
    %37 = vector.load %arg8[%c0_20, %c0_21] : memref<8x128xf32, #tpu.memory_space<vmem>>, vector<8x128xf32>
    tpu.vector_store %arg8[%c0_20, %c0_21], %36 {strides = array<i32>} : memref<8x128xf32, #tpu.memory_space<vmem>>, vector<8x128xf32>,
    return
  }
  func.func @transform_0(%arg0: i32) -> (i32, i32) {
    %c0_i32 = arith.constant 0 : i32
    %c0_i32_0 = arith.constant 0 : i32
    return %arg0, %c0_i32 : i32, i32
  }
  func.func @transform_1(%arg0: i32) -> (i32, i32) {
    %c0_i32 = arith.constant 0 : i32
    %c0_i32_0 = arith.constant 0 : i32
    %c0_i32_1 = arith.constant 0 : i32
    return %c0_i32, %c0_i32_0 : i32, i32
  }
  func.func @transform_2(%arg0: i32) -> (i32, i32) {
    %c0_i32 = arith.constant 0 : i32
    %c0_i32_0 = arith.constant 0 : i32
    %c0_i32_1 = arith.constant 0 : i32
    return %c0_i32, %c0_i32_0 : i32, i32
  }
  func.func @transform_3(%arg0: i32) -> (i32, i32) {
    %c0_i32 = arith.constant 0 : i32
    %c0_i32_0 = arith.constant 0 : i32
    %c0_i32_1 = arith.constant 0 : i32
    return %c0_i32, %c0_i32_0 : i32, i32
  }
  func.func @transform_4(%arg0: i32) -> (i32, i32) {
    %c0_i32 = arith.constant 0 : i32
    %c0_i32_0 = arith.constant 0 : i32
    %c0_i32_1 = arith.constant 0 : i32
    return %c0_i32, %c0_i32_0 : i32, i32
  }
  func.func @transform_5(%arg0: i32) -> (i32, i32) {
    %c0_i32 = arith.constant 0 : i32
    %c0_i32_0 = arith.constant 0 : i32
    %c0_i32_1 = arith.constant 0 : i32
    return %c0_i32, %c0_i32_0 : i32, i32
  }
  func.func @transform_6(%arg0: i32) -> (i32, i32) {
    %c0_i32 = arith.constant 0 : i32
    %c0_i32_0 = arith.constant 0 : i32
    %c0_i32_1 = arith.constant 0 : i32
    return %c0_i32, %c0_i32_0 : i32, i32
  }
  func.func @transform_7(%arg0: i32) -> (i32, i32) {
    %c0_i32 = arith.constant 0 : i32
    %c0_i32_0 = arith.constant 0 : i32
    return %arg0, %c0_i32 : i32, i32
  }
}

</mosaic_0001>

<llo_original>
// kernel: mnist_flat_forward.1
$region0: #{mnist_flat_forward.1}
  #allocation0 [shape = 'u32[]', space=smem, size = 0x4, offset = 0x4, fixed_abs, tag = 'smem constant byte address 0x4 - core index']
  #allocation1 [shape = 'u32[144,128]{1,0:T(1,128)}', space=vmem, size = 0x12000, scoped, tag = 'internal scratch']
  %s0 = inlined_call_operand.vmem [shape: f32[8,784], index: 0, kind: input, shape index: {}]
  %s1 = inlined_call_operand.vmem [shape: bf16[784,512], index: 1, kind: input, shape index: {}]
  %s2 = inlined_call_operand.vmem [shape: f32[1,512], index: 2, kind: input, shape index: {}]
  %s3 = inlined_call_operand.vmem [shape: bf16[512,128], index: 3, kind: input, shape index: {}]
  %s4 = inlined_call_operand.vmem [shape: f32[1,128], index: 4, kind: input, shape index: {}]
  %s5 = inlined_call_operand.vmem [shape: bf16[128,128], index: 5, kind: input, shape index: {}]
  %s6 = inlined_call_operand.vmem [shape: f32[1,128], index: 6, kind: input, shape index: {}]
  %s7 = inlined_call_operand.hbm [shape: f32[8,128], index: 7, kind: output, shape index: {}]
  %s8 = sld [smem:[#allocation0]]
  $region38: #{mnist_flat_forward.1} parent=0
    _
  %s10 = ssub.s32 1, %s8
  %s11 = scalar_select 0, %s10, %s8
  $region1: #{mnist_flat_forward.1} parent=0
    #allocation2 [shape = 'u8[4096]{0}', space=vmem, size = 0x1000, scoped, tag = 'output window, operand 0, single buffered']
    #allocation3 [shape = 's32[1]{0}', space=sflag, size = 0x4, scoped, tag = 'scoped memory for mnist_flat_forward.1']
    %12 = vsyncpa [#allocation3], 0
    // Predicated region
    $region2: #{mnist_flat_forward.1} parent=1 // pred_check
      _
    $region3: #{mnist_flat_forward.1} parent=1 // pred_check_branch
      %14 = sbr.rel (0) target = $region5
    $region4: #{mnist_flat_forward.1} parent=1 // pred_region
      _
    $region5: #{mnist_flat_forward.1} parent=1 // pred_fallthru
      _
    // Predicated region
    $region6: #{mnist_flat_forward.1} parent=1 // pred_check
      _
    $region7: #{mnist_flat_forward.1} parent=1 // pred_check_branch
      %16 = sbr.rel (0) target = $region9
    $region8: #{mnist_flat_forward.1} parent=1 // pred_region
      _
    $region9: #{mnist_flat_forward.1} parent=1 // pred_fallthru
      _
    // Predicated region
    $region10: #{mnist_flat_forward.1} parent=1 // pred_check
      _
    $region11: #{mnist_flat_forward.1} parent=1 // pred_check_branch
      %18 = sbr.rel (0) target = $region13
    $region12: #{mnist_flat_forward.1} parent=1 // pred_region
      _
    $region13: #{mnist_flat_forward.1} parent=1 // pred_fallthru
      _
    // Predicated region
    $region14: #{mnist_flat_forward.1} parent=1 // pred_check
      _
    $region15: #{mnist_flat_forward.1} parent=1 // pred_check_branch
      %20 = sbr.rel (0) target = $region17
    $region16: #{mnist_flat_forward.1} parent=1 // pred_region
      _
    $region17: #{mnist_flat_forward.1} parent=1 // pred_fallthru
      _
    // Predicated region
    $region18: #{mnist_flat_forward.1} parent=1 // pred_check
      _
    $region19: #{mnist_flat_forward.1} parent=1 // pred_check_branch
      %22 = sbr.rel (0) target = $region21
    $region20: #{mnist_flat_forward.1} parent=1 // pred_region
      _
    $region21: #{mnist_flat_forward.1} parent=1 // pred_fallthru
      _
    // Predicated region
    $region22: #{mnist_flat_forward.1} parent=1 // pred_check
      _
    $region23: #{mnist_flat_forward.1} parent=1 // pred_check_branch
      %24 = sbr.rel (0) target = $region25
    $region24: #{mnist_flat_forward.1} parent=1 // pred_region
      _
    $region25: #{mnist_flat_forward.1} parent=1 // pred_fallthru
      _
    // Predicated region
    $region26: #{mnist_flat_forward.1} parent=1 // pred_check
      _
    $region27: #{mnist_flat_forward.1} parent=1 // pred_check_branch
      %26 = sbr.rel (0) target = $region29
    $region28: #{mnist_flat_forward.1} parent=1 // pred_region
      _
    $region29: #{mnist_flat_forward.1} parent=1 // pred_fallthru
      _
    %v28 = vld [vmem:[%s0] sm:$0xff]
    %v29 = vld [vmem:[%s0 + $0x8] sm:$0xff]
    %v30 = vld [vmem:[%s0 + $0x10] sm:$0xff]
    %v31 = vld [vmem:[%s0 + $0x18] sm:$0xff]
    %v32 = vld [vmem:[%s0 + $0x20] sm:$0xff]
    %v33 = vld [vmem:[%s0 + $0x28] sm:$0xff]
    %v34 = vld [vmem:[%s0 + $0x30] sm:$0xff]
    %v35 = vpack.c.bf16 %v28, %v28
    %v36 = vpack.c.bf16 %v29, %v29
    %v37 = vpack.c.bf16 %v30, %v30
    %v38 = vpack.c.bf16 %v31, %v31
    %v39 = vpack.c.bf16 %v32, %v32
    %v40 = vpack.c.bf16 %v33, %v33
    %v41 = vpack.c.bf16 %v34, %v34
    %v42 = vld [vmem:[%s1] sm:$0xff]
    %v43 = vld [vmem:[%s1 + $0x8] sm:$0xff]
    %v44 = vld [vmem:[%s1 + $0x10] sm:$0xff]
    %v45 = vld [vmem:[%s1 + $0x18] sm:$0xff]
    %v46 = vld [vmem:[%s1 + $0x20] sm:$0xff]
    %v47 = vld [vmem:[%s1 + $0x28] sm:$0xff]
    %v48 = vld [vmem:[%s1 + $0x30] sm:$0xff]
    %v49 = vld [vmem:[%s1 + $0x38] sm:$0xff]
    %v50 = vld [vmem:[%s1 + $0x40] sm:$0xff]
    %v51 = vld [vmem:[%s1 + $0x48] sm:$0xff]
    %v52 = vld [vmem:[%s1 + $0x50] sm:$0xff]
    %v53 = vld [vmem:[%s1 + $0x58] sm:$0xff]
    %v54 = vld [vmem:[%s1 + $0x60] sm:$0xff]
    %v55 = vld [vmem:[%s1 + $0x68] sm:$0xff]
    %v56 = vld [vmem:[%s1 + $0x70] sm:$0xff]
    %v57 = vld [vmem:[%s1 + $0x78] sm:$0xff]
    %v58 = vld [vmem:[%s1 + $0x80] sm:$0xff]
    %v59 = vld [vmem:[%s1 + $0x88] sm:$0xff]
    %v60 = vld [vmem:[%s1 + $0x90] sm:$0xff]
    %v61 = vld [vmem:[%s1 + $0x98] sm:$0xff]
    %v62 = vld [vmem:[%s1 + $0xa0] sm:$0xff]
    %v63 = vld [vmem:[%s1 + $0xa8] sm:$0xff]
    %v64 = vld [vmem:[%s1 + $0xb0] sm:$0xff]
    %v65 = vld [vmem:[%s1 + $0xb8] sm:$0xff]
    %v66 = vld [vmem:[%s1 + $0xc0] sm:$0xff]
    %v67 = vld [vmem:[%s1 + $0xc8] sm:$0xff]
    %v68 = vld [vmem:[%s1 + $0xd0] sm:$0xff]
    %v69 = vld [vmem:[%s1 + $0xd8] sm:$0xff]
    %v70 = vld [vmem:[%s1 + $0xe0] sm:$0xff]
    %v71 = vld [vmem:[%s1 + $0xe8] sm:$0xff]
    %v72 = vld [vmem:[%s1 + $0xf0] sm:$0xff]
    %v73 = vld [vmem:[%s1 + $0xf8] sm:$0xff]
    %v74 = vld [vmem:[%s1 + $0x100] sm:$0xff]
    %v75 = vld [vmem:[%s1 + $0x108] sm:$0xff]
    %v76 = vld [vmem:[%s1 + $0x110] sm:$0xff]
    %v77 = vld [vmem:[%s1 + $0x118] sm:$0xff]
    %v78 = vld [vmem:[%s1 + $0x120] sm:$0xff]
    %v79 = vld [vmem:[%s1 + $0x128] sm:$0xff]
    %v80 = vld [vmem:[%s1 + $0x130] sm:$0xff]
    %v81 = vld [vmem:[%s1 + $0x138] sm:$0xff]
    %v82 = vld [vmem:[%s1 + $0x140] sm:$0xff]
    %v83 = vld [vmem:[%s1 + $0x148] sm:$0xff]
    %v84 = vld [vmem:[%s1 + $0x150] sm:$0xff]
    %v85 = vld [vmem:[%s1 + $0x158] sm:$0xff]
    %v86 = vld [vmem:[%s1 + $0x160] sm:$0xff]
    %v87 = vld [vmem:[%s1 + $0x168] sm:$0xff]
    %v88 = vld [vmem:[%s1 + $0x170] sm:$0xff]
    %v89 = vld [vmem:[%s1 + $0x178] sm:$0xff]
    %v90 = vld [vmem:[%s1 + $0x180] sm:$0xff]
    %v91 = vld [vmem:[%s1 + $0x188] sm:$0xff]
    %v92 = vld [vmem:[%s1 + $0x190] sm:$0xff]
    %v93 = vld [vmem:[%s1 + $0x198] sm:$0xff]
    %v94 = vld [vmem:[%s1 + $0x1a0] sm:$0xff]
    %v95 = vld [vmem:[%s1 + $0x1a8] sm:$0xff]
    %v96 = vld [vmem:[%s1 + $0x1b0] sm:$0xff]
    %v97 = vld [vmem:[%s1 + $0x1b8] sm:$0xff]
    %v98 = vld [vmem:[%s1 + $0x1c0] sm:$0xff]
    %v99 = vld [vmem:[%s1 + $0x1c8] sm:$0xff]
    %v100 = vld [vmem:[%s1 + $0x1d0] sm:$0xff]
    %v101 = vld [vmem:[%s1 + $0x1d8] sm:$0xff]
    %v102 = vld [vmem:[%s1 + $0x1e0] sm:$0xff]
    %v103 = vld [vmem:[%s1 + $0x1e8] sm:$0xff]
    %v104 = vld [vmem:[%s1 + $0x1f0] sm:$0xff]
    %v105 = vld [vmem:[%s1 + $0x1f8] sm:$0xff]
    %v106 = vld [vmem:[%s1 + $0x200] sm:$0xff]
    %v107 = vld [vmem:[%s1 + $0x208] sm:$0xff]
    %v108 = vld [vmem:[%s1 + $0x210] sm:$0xff]
    %v109 = vld [vmem:[%s1 + $0x218] sm:$0xff]
    %v110 = vld [vmem:[%s1 + $0x220] sm:$0xff]
    %v111 = vld [vmem:[%s1 + $0x228] sm:$0xff]
    %v112 = vld [vmem:[%s1 + $0x230] sm:$0xff]
    %v113 = vld [vmem:[%s1 + $0x238] sm:$0xff]
    %v114 = vld [vmem:[%s1 + $0x240] sm:$0xff]
    %v115 = vld [vmem:[%s1 + $0x248] sm:$0xff]
    %v116 = vld [vmem:[%s1 + $0x250] sm:$0xff]
    %v117 = vld [vmem:[%s1 + $0x258] sm:$0xff]
    %v118 = vld [vmem:[%s1 + $0x260] sm:$0xff]
    %v119 = vld [vmem:[%s1 + $0x268] sm:$0xff]
    %v120 = vld [vmem:[%s1 + $0x270] sm:$0xff]
    %v121 = vld [vmem:[%s1 + $0x278] sm:$0xff]
    %v122 = vld [vmem:[%s1 + $0x280] sm:$0xff]
    %v123 = vld [vmem:[%s1 + $0x288] sm:$0xff]
    %v124 = vld [vmem:[%s1 + $0x290] sm:$0xff]
    %v125 = vld [vmem:[%s1 + $0x298] sm:$0xff]
    %v126 = vld [vmem:[%s1 + $0x2a0] sm:$0xff]
    %v127 = vld [vmem:[%s1 + $0x2a8] sm:$0xff]
    %v128 = vld [vmem:[%s1 + $0x2b0] sm:$0xff]
    %v129 = vld [vmem:[%s1 + $0x2b8] sm:$0xff]
    %v130 = vld [vmem:[%s1 + $0x2c0] sm:$0xff]
    %v131 = vld [vmem:[%s1 + $0x2c8] sm:$0xff]
    %v132 = vld [vmem:[%s1 + $0x2d0] sm:$0xff]
    %v133 = vld [vmem:[%s1 + $0x2d8] sm:$0xff]
    %v134 = vld [vmem:[%s1 + $0x2e0] sm:$0xff]
    %v135 = vld [vmem:[%s1 + $0x2e8] sm:$0xff]
    %v136 = vld [vmem:[%s1 + $0x2f0] sm:$0xff]
    %v137 = vld [vmem:[%s1 + $0x2f8] sm:$0xff]
    %v138 = vld [vmem:[%s1 + $0x300] sm:$0xff]
    %v139 = vld [vmem:[%s1 + $0x308] sm:$0xff]
    %v140 = vld [vmem:[%s1 + $0x310] sm:$0xff]
    %v141 = vld [vmem:[%s1 + $0x318] sm:$0xff]
    %v142 = vld [vmem:[%s1 + $0x320] sm:$0xff]
    %v143 = vld [vmem:[%s1 + $0x328] sm:$0xff]
    %v144 = vld [vmem:[%s1 + $0x330] sm:$0xff]
    %v145 = vld [vmem:[%s1 + $0x338] sm:$0xff]
    %v146 = vld [vmem:[%s1 + $0x340] sm:$0xff]
    %v147 = vld [vmem:[%s1 + $0x348] sm:$0xff]
    %v148 = vld [vmem:[%s1 + $0x350] sm:$0xff]
    %v149 = vld [vmem:[%s1 + $0x358] sm:$0xff]
    %v150 = vld [vmem:[%s1 + $0x360] sm:$0xff]
    %v151 = vld [vmem:[%s1 + $0x368] sm:$0xff]
    %v152 = vld [vmem:[%s1 + $0x370] sm:$0xff]
    %v153 = vld [vmem:[%s1 + $0x378] sm:$0xff]
    %v154 = vld [vmem:[%s1 + $0x380] sm:$0xff]
    %v155 = vld [vmem:[%s1 + $0x388] sm:$0xff]
    %v156 = vld [vmem:[%s1 + $0x390] sm:$0xff]
    %v157 = vld [vmem:[%s1 + $0x398] sm:$0xff]
    %v158 = vld [vmem:[%s1 + $0x3a0] sm:$0xff]
    %v159 = vld [vmem:[%s1 + $0x3a8] sm:$0xff]
    %v160 = vld [vmem:[%s1 + $0x3b0] sm:$0xff]
    %v161 = vld [vmem:[%s1 + $0x3b8] sm:$0xff]
    %v162 = vld [vmem:[%s1 + $0x3c0] sm:$0xff]
    %v163 = vld [vmem:[%s1 + $0x3c8] sm:$0xff]
    %v164 = vld [vmem:[%s1 + $0x3d0] sm:$0xff]
    %v165 = vld [vmem:[%s1 + $0x3d8] sm:$0xff]
    %v166 = vld [vmem:[%s1 + $0x3e0] sm:$0xff]
    %v167 = vld [vmem:[%s1 + $0x3e8] sm:$0xff]
    %v168 = vld [vmem:[%s1 + $0x3f0] sm:$0xff]
    %v169 = vld [vmem:[%s1 + $0x3f8] sm:$0xff]
    %v170 = vld [vmem:[%s1 + $0x400] sm:$0xff]
    %v171 = vld [vmem:[%s1 + $0x408] sm:$0xff]
    %v172 = vld [vmem:[%s1 + $0x410] sm:$0xff]
    %v173 = vld [vmem:[%s1 + $0x418] sm:$0xff]
    %v174 = vld [vmem:[%s1 + $0x420] sm:$0xff]
    %v175 = vld [vmem:[%s1 + $0x428] sm:$0xff]
    %v176 = vld [vmem:[%s1 + $0x430] sm:$0xff]
    %v177 = vld [vmem:[%s1 + $0x438] sm:$0xff]
    %v178 = vld [vmem:[%s1 + $0x440] sm:$0xff]
    %v179 = vld [vmem:[%s1 + $0x448] sm:$0xff]
    %v180 = vld [vmem:[%s1 + $0x450] sm:$0xff]
    %v181 = vld [vmem:[%s1 + $0x458] sm:$0xff]
    %v182 = vld [vmem:[%s1 + $0x460] sm:$0xff]
    %v183 = vld [vmem:[%s1 + $0x468] sm:$0xff]
    %v184 = vld [vmem:[%s1 + $0x470] sm:$0xff]
    %v185 = vld [vmem:[%s1 + $0x478] sm:$0xff]
    %v186 = vld [vmem:[%s1 + $0x480] sm:$0xff]
    %v187 = vld [vmem:[%s1 + $0x488] sm:$0xff]
    %v188 = vld [vmem:[%s1 + $0x490] sm:$0xff]
    %v189 = vld [vmem:[%s1 + $0x498] sm:$0xff]
    %v190 = vld [vmem:[%s1 + $0x4a0] sm:$0xff]
    %v191 = vld [vmem:[%s1 + $0x4a8] sm:$0xff]
    %v192 = vld [vmem:[%s1 + $0x4b0] sm:$0xff]
    %v193 = vld [vmem:[%s1 + $0x4b8] sm:$0xff]
    %v194 = vld [vmem:[%s1 + $0x4c0] sm:$0xff]
    %v195 = vld [vmem:[%s1 + $0x4c8] sm:$0xff]
    %v196 = vld [vmem:[%s1 + $0x4d0] sm:$0xff]
    %v197 = vld [vmem:[%s1 + $0x4d8] sm:$0xff]
    %v198 = vld [vmem:[%s1 + $0x4e0] sm:$0xff]
    %v199 = vld [vmem:[%s1 + $0x4e8] sm:$0xff]
    %v200 = vld [vmem:[%s1 + $0x4f0] sm:$0xff]
    %v201 = vld [vmem:[%s1 + $0x4f8] sm:$0xff]
    %v202 = vld [vmem:[%s1 + $0x500] sm:$0xff]
    %v203 = vld [vmem:[%s1 + $0x508] sm:$0xff]
    %v204 = vld [vmem:[%s1 + $0x510] sm:$0xff]
    %v205 = vld [vmem:[%s1 + $0x518] sm:$0xff]
    %v206 = vld [vmem:[%s1 + $0x520] sm:$0xff]
    %v207 = vld [vmem:[%s1 + $0x528] sm:$0xff]
    %v208 = vld [vmem:[%s1 + $0x530] sm:$0xff]
    %v209 = vld [vmem:[%s1 + $0x538] sm:$0xff]
    %v210 = vld [vmem:[%s1 + $0x540] sm:$0xff]
    %v211 = vld [vmem:[%s1 + $0x548] sm:$0xff]
    %v212 = vld [vmem:[%s1 + $0x550] sm:$0xff]
    %v213 = vld [vmem:[%s1 + $0x558] sm:$0xff]
    %v214 = vld [vmem:[%s1 + $0x560] sm:$0xff]
    %v215 = vld [vmem:[%s1 + $0x568] sm:$0xff]
    %v216 = vld [vmem:[%s1 + $0x570] sm:$0xff]
    %v217 = vld [vmem:[%s1 + $0x578] sm:$0xff]
    %v218 = vld [vmem:[%s1 + $0x580] sm:$0xff]
    %v219 = vld [vmem:[%s1 + $0x588] sm:$0xff]
    %v220 = vld [vmem:[%s1 + $0x590] sm:$0xff]
    %v221 = vld [vmem:[%s1 + $0x598] sm:$0xff]
    %v222 = vld [vmem:[%s1 + $0x5a0] sm:$0xff]
    %v223 = vld [vmem:[%s1 + $0x5a8] sm:$0xff]
    %v224 = vld [vmem:[%s1 + $0x5b0] sm:$0xff]
    %v225 = vld [vmem:[%s1 + $0x5b8] sm:$0xff]
    %v226 = vld [vmem:[%s1 + $0x5c0] sm:$0xff]
    %v227 = vld [vmem:[%s1 + $0x5c8] sm:$0xff]
    %v228 = vld [vmem:[%s1 + $0x5d0] sm:$0xff]
    %v229 = vld [vmem:[%s1 + $0x5d8] sm:$0xff]
    %v230 = vld [vmem:[%s1 + $0x5e0] sm:$0xff]
    %v231 = vld [vmem:[%s1 + $0x5e8] sm:$0xff]
    %v232 = vld [vmem:[%s1 + $0x5f0] sm:$0xff]
    %v233 = vld [vmem:[%s1 + $0x5f8] sm:$0xff]
    %v234 = vld [vmem:[%s1 + $0x600] sm:$0xff]
    %v235 = vld [vmem:[%s1 + $0x608] sm:$0xff]
    %v236 = vld [vmem:[%s1 + $0x610] sm:$0xff]
    %v237 = vld [vmem:[%s1 + $0x618] sm:$0xff]
    %v238 = vld [vmem:[%s2] sm:$0xf]
    %v240 = vlaneseq
    %v241 = vshrl.u32 %v240, 7
    %v242 = vsub.s32 0, %v241
    %v243 = vrot.slane %v238, %v242
    %v244 = vlaneseq
    %v245 = vshrl.u32 %v244, 7
    %v246 = vsub.s32 1, %v245
    %v247 = vrot.slane %v238, %v246
    %v248 = vlaneseq
    %v249 = vshrl.u32 %v248, 7
    %v250 = vsub.s32 2, %v249
    %v251 = vrot.slane %v238, %v250
    %v252 = vlaneseq
    %v253 = vshrl.u32 %v252, 7
    %v254 = vsub.s32 3, %v253
    %v255 = vrot.slane %v238, %v254
    %v456 = vunpack.c.l.b16 %v42
    %v457 = vunpack.c.h.b16 %v42
    %v458 = vunpack.c.l.b16 %v43
    %v459 = vunpack.c.h.b16 %v43
    %v460 = vunpack.c.l.b16 %v44
    %v461 = vunpack.c.h.b16 %v44
    %v462 = vunpack.c.l.b16 %v45
    %v463 = vunpack.c.h.b16 %v45
    %v464 = vunpack.c.l.b16 %v46
    %v465 = vunpack.c.h.b16 %v46
    %v466 = vunpack.c.l.b16 %v47
    %v467 = vunpack.c.h.b16 %v47
    %v468 = vunpack.c.l.b16 %v48
    %v469 = vunpack.c.h.b16 %v48
    %v470 = vunpack.c.l.b16 %v49
    %v471 = vunpack.c.h.b16 %v49
    %v472 = vunpack.c.l.b16 %v50
    %v473 = vunpack.c.h.b16 %v50
    %v474 = vunpack.c.l.b16 %v51
    %v475 = vunpack.c.h.b16 %v51
    %v476 = vunpack.c.l.b16 %v52
    %v477 = vunpack.c.h.b16 %v52
    %v478 = vunpack.c.l.b16 %v53
    %v479 = vunpack.c.h.b16 %v53
    %v480 = vunpack.c.l.b16 %v54
    %v481 = vunpack.c.h.b16 %v54
    %v482 = vunpack.c.l.b16 %v55
    %v483 = vunpack.c.h.b16 %v55
    %v484 = vunpack.c.l.b16 %v56
    %v485 = vunpack.c.h.b16 %v56
    %v486 = vunpack.c.l.b16 %v57
    %v487 = vunpack.c.h.b16 %v57
    %v488 = vunpack.c.l.b16 %v58
    %v489 = vunpack.c.h.b16 %v58
    %v490 = vunpack.c.l.b16 %v59
    %v491 = vunpack.c.h.b16 %v59
    %v492 = vunpack.c.l.b16 %v60
    %v493 = vunpack.c.h.b16 %v60
    %v494 = vunpack.c.l.b16 %v61
    %v495 = vunpack.c.h.b16 %v61
    %v496 = vunpack.c.l.b16 %v62
    %v497 = vunpack.c.h.b16 %v62
    %v498 = vunpack.c.l.b16 %v63
    %v499 = vunpack.c.h.b16 %v63
    %v500 = vunpack.c.l.b16 %v64
    %v501 = vunpack.c.h.b16 %v64
    %v502 = vunpack.c.l.b16 %v65
    %v503 = vunpack.c.h.b16 %v65
    %v504 = vunpack.c.l.b16 %v66
    %v505 = vunpack.c.h.b16 %v66
    %v506 = vunpack.c.l.b16 %v67
    %v507 = vunpack.c.h.b16 %v67
    %v508 = vunpack.c.l.b16 %v68
    %v509 = vunpack.c.h.b16 %v68
    %v510 = vunpack.c.l.b16 %v69
    %v511 = vunpack.c.h.b16 %v69
    %v512 = vunpack.c.l.b16 %v70
    %v513 = vunpack.c.h.b16 %v70
    %v514 = vunpack.c.l.b16 %v71
    %v515 = vunpack.c.h.b16 %v71
    %v516 = vunpack.c.l.b16 %v72
    %v517 = vunpack.c.h.b16 %v72
    %v518 = vunpack.c.l.b16 %v73
    %v519 = vunpack.c.h.b16 %v73
    %v520 = vunpack.c.l.b16 %v74
    %v521 = vunpack.c.h.b16 %v74
    %v522 = vunpack.c.l.b16 %v75
    %v523 = vunpack.c.h.b16 %v75
    %v524 = vunpack.c.l.b16 %v76
    %v525 = vunpack.c.h.b16 %v76
    %v526 = vunpack.c.l.b16 %v77
    %v527 = vunpack.c.h.b16 %v77
    %v528 = vunpack.c.l.b16 %v78
    %v529 = vunpack.c.h.b16 %v78
    %v530 = vunpack.c.l.b16 %v79
    %v531 = vunpack.c.h.b16 %v79
    %v532 = vunpack.c.l.b16 %v80
    %v533 = vunpack.c.h.b16 %v80
    %v534 = vunpack.c.l.b16 %v81
    %v535 = vunpack.c.h.b16 %v81
    %v536 = vunpack.c.l.b16 %v82
    %v537 = vunpack.c.h.b16 %v82
    %v538 = vunpack.c.l.b16 %v83
    %v539 = vunpack.c.h.b16 %v83
    %v540 = vunpack.c.l.b16 %v84
    %v541 = vunpack.c.h.b16 %v84
    %v542 = vunpack.c.l.b16 %v85
    %v543 = vunpack.c.h.b16 %v85
    %v544 = vunpack.c.l.b16 %v86
    %v545 = vunpack.c.h.b16 %v86
    %v546 = vunpack.c.l.b16 %v87
    %v547 = vunpack.c.h.b16 %v87
    %v548 = vunpack.c.l.b16 %v88
    %v549 = vunpack.c.h.b16 %v88
    %v550 = vunpack.c.l.b16 %v89
    %v551 = vunpack.c.h.b16 %v89
    %v552 = vunpack.c.l.b16 %v90
    %v553 = vunpack.c.h.b16 %v90
    %v554 = vunpack.c.l.b16 %v91
    %v555 = vunpack.c.h.b16 %v91
    %v556 = vunpack.c.l.b16 %v92
    %v557 = vunpack.c.h.b16 %v92
    %v558 = vunpack.c.l.b16 %v93
    %v559 = vunpack.c.h.b16 %v93
    %v560 = vunpack.c.l.b16 %v94
    %v561 = vunpack.c.h.b16 %v94
    %v562 = vunpack.c.l.b16 %v95
    %v563 = vunpack.c.h.b16 %v95
    %v564 = vunpack.c.l.b16 %v96
    %v565 = vunpack.c.h.b16 %v96
    %v566 = vunpack.c.l.b16 %v97
    %v567 = vunpack.c.h.b16 %v97
    %v568 = vunpack.c.l.b16 %v98
    %v569 = vunpack.c.h.b16 %v98
    %v570 = vunpack.c.l.b16 %v99
    %v571 = vunpack.c.h.b16 %v99
    %v572 = vunpack.c.l.b16 %v100
    %v573 = vunpack.c.h.b16 %v100
    %v574 = vunpack.c.l.b16 %v101
    %v575 = vunpack.c.h.b16 %v101
    %v576 = vunpack.c.l.b16 %v102
    %v577 = vunpack.c.h.b16 %v102
    %v578 = vunpack.c.l.b16 %v103
    %v579 = vunpack.c.h.b16 %v103
    %v580 = vunpack.c.l.b16 %v104
    %v581 = vunpack.c.h.b16 %v104
    %v582 = vunpack.c.l.b16 %v105
    %v583 = vunpack.c.h.b16 %v105
    %v584 = vunpack.c.l.b16 %v106
    %v585 = vunpack.c.h.b16 %v106
    %v586 = vunpack.c.l.b16 %v107
    %v587 = vunpack.c.h.b16 %v107
    %v588 = vunpack.c.l.b16 %v108
    %v589 = vunpack.c.h.b16 %v108
    %v590 = vunpack.c.l.b16 %v109
    %v591 = vunpack.c.h.b16 %v109
    %v592 = vunpack.c.l.b16 %v110
    %v593 = vunpack.c.h.b16 %v110
    %v594 = vunpack.c.l.b16 %v111
    %v595 = vunpack.c.h.b16 %v111
    %v596 = vunpack.c.l.b16 %v112
    %v597 = vunpack.c.h.b16 %v112
    %v598 = vunpack.c.l.b16 %v113
    %v599 = vunpack.c.h.b16 %v113
    %v600 = vunpack.c.l.b16 %v114
    %v601 = vunpack.c.h.b16 %v114
    %v602 = vunpack.c.l.b16 %v115
    %v603 = vunpack.c.h.b16 %v115
    %v604 = vunpack.c.l.b16 %v116
    %v605 = vunpack.c.h.b16 %v116
    %v606 = vunpack.c.l.b16 %v117
    %v607 = vunpack.c.h.b16 %v117
    %v608 = vunpack.c.l.b16 %v118
    %v609 = vunpack.c.h.b16 %v118
    %v610 = vunpack.c.l.b16 %v119
    %v611 = vunpack.c.h.b16 %v119
    %v612 = vunpack.c.l.b16 %v120
    %v613 = vunpack.c.h.b16 %v120
    %v614 = vunpack.c.l.b16 %v121
    %v615 = vunpack.c.h.b16 %v121
    %v616 = vunpack.c.l.b16 %v122
    %v617 = vunpack.c.h.b16 %v122
    %v618 = vunpack.c.l.b16 %v123
    %v619 = vunpack.c.h.b16 %v123
    %v620 = vunpack.c.l.b16 %v124
    %v621 = vunpack.c.h.b16 %v124
    %v622 = vunpack.c.l.b16 %v125
    %v623 = vunpack.c.h.b16 %v125
    %v624 = vunpack.c.l.b16 %v126
    %v625 = vunpack.c.h.b16 %v126
    %v626 = vunpack.c.l.b16 %v127
    %v627 = vunpack.c.h.b16 %v127
    %v628 = vunpack.c.l.b16 %v128
    %v629 = vunpack.c.h.b16 %v128
    %v630 = vunpack.c.l.b16 %v129
    %v631 = vunpack.c.h.b16 %v129
    %v632 = vunpack.c.l.b16 %v130
    %v633 = vunpack.c.h.b16 %v130
    %v634 = vunpack.c.l.b16 %v131
    %v635 = vunpack.c.h.b16 %v131
    %v636 = vunpack.c.l.b16 %v132
    %v637 = vunpack.c.h.b16 %v132
    %v638 = vunpack.c.l.b16 %v133
    %v639 = vunpack.c.h.b16 %v133
    %v640 = vunpack.c.l.b16 %v134
    %v641 = vunpack.c.h.b16 %v134
    %v642 = vunpack.c.l.b16 %v135
    %v643 = vunpack.c.h.b16 %v135
    %v644 = vunpack.c.l.b16 %v136
    %v645 = vunpack.c.h.b16 %v136
    %v646 = vunpack.c.l.b16 %v137
    %v647 = vunpack.c.h.b16 %v137
    %v648 = vunpack.c.l.b16 %v138
    %v649 = vunpack.c.h.b16 %v138
    %v650 = vunpack.c.l.b16 %v139
    %v651 = vunpack.c.h.b16 %v139
    %v652 = vunpack.c.l.b16 %v140
    %v653 = vunpack.c.h.b16 %v140
    %v654 = vunpack.c.l.b16 %v141
    %v655 = vunpack.c.h.b16 %v141
    %v656 = vunpack.c.l.b16 %v142
    %v657 = vunpack.c.h.b16 %v142
    %v658 = vunpack.c.l.b16 %v143
    %v659 = vunpack.c.h.b16 %v143
    %v660 = vunpack.c.l.b16 %v144
    %v661 = vunpack.c.h.b16 %v144
    %v662 = vunpack.c.l.b16 %v145
    %v663 = vunpack.c.h.b16 %v145
    %v664 = vunpack.c.l.b16 %v146
    %v665 = vunpack.c.h.b16 %v146
    %v666 = vunpack.c.l.b16 %v147
    %v667 = vunpack.c.h.b16 %v147
    %v668 = vunpack.c.l.b16 %v148
    %v669 = vunpack.c.h.b16 %v148
    %v670 = vunpack.c.l.b16 %v149
    %v671 = vunpack.c.h.b16 %v149
    %v672 = vunpack.c.l.b16 %v150
    %v673 = vunpack.c.h.b16 %v150
    %v674 = vunpack.c.l.b16 %v151
    %v675 = vunpack.c.h.b16 %v151
    %v676 = vunpack.c.l.b16 %v152
    %v677 = vunpack.c.h.b16 %v152
    %v678 = vunpack.c.l.b16 %v153
    %v679 = vunpack.c.h.b16 %v153
    %v680 = vunpack.c.l.b16 %v154
    %v681 = vunpack.c.h.b16 %v154
    %v682 = vunpack.c.l.b16 %v155
    %v683 = vunpack.c.h.b16 %v155
    %v684 = vunpack.c.l.b16 %v156
    %v685 = vunpack.c.h.b16 %v156
    %v686 = vunpack.c.l.b16 %v157
    %v687 = vunpack.c.h.b16 %v157
    %v688 = vunpack.c.l.b16 %v158
    %v689 = vunpack.c.h.b16 %v158
    %v690 = vunpack.c.l.b16 %v159
    %v691 = vunpack.c.h.b16 %v159
    %v692 = vunpack.c.l.b16 %v160
    %v693 = vunpack.c.h.b16 %v160
    %v694 = vunpack.c.l.b16 %v161
    %v695 = vunpack.c.h.b16 %v161
    %v696 = vunpack.c.l.b16 %v162
    %v697 = vunpack.c.h.b16 %v162
    %v698 = vunpack.c.l.b16 %v163
    %v699 = vunpack.c.h.b16 %v163
    %v700 = vunpack.c.l.b16 %v164
    %v701 = vunpack.c.h.b16 %v164
    %v702 = vunpack.c.l.b16 %v165
    %v703 = vunpack.c.h.b16 %v165
    %v704 = vunpack.c.l.b16 %v166
    %v705 = vunpack.c.h.b16 %v166
    %v706 = vunpack.c.l.b16 %v167
    %v707 = vunpack.c.h.b16 %v167
    %v708 = vunpack.c.l.b16 %v168
    %v709 = vunpack.c.h.b16 %v168
    %v710 = vunpack.c.l.b16 %v169
    %v711 = vunpack.c.h.b16 %v169
    %v712 = vunpack.c.l.b16 %v170
    %v713 = vunpack.c.h.b16 %v170
    %v714 = vunpack.c.l.b16 %v171
    %v715 = vunpack.c.h.b16 %v171
    %v716 = vunpack.c.l.b16 %v172
    %v717 = vunpack.c.h.b16 %v172
    %v718 = vunpack.c.l.b16 %v173
    %v719 = vunpack.c.h.b16 %v173
    %v720 = vunpack.c.l.b16 %v174
    %v721 = vunpack.c.h.b16 %v174
    %v722 = vunpack.c.l.b16 %v175
    %v723 = vunpack.c.h.b16 %v175
    %v724 = vunpack.c.l.b16 %v176
    %v725 = vunpack.c.h.b16 %v176
    %v726 = vunpack.c.l.b16 %v177
    %v727 = vunpack.c.h.b16 %v177
    %v728 = vunpack.c.l.b16 %v178
    %v729 = vunpack.c.h.b16 %v178
    %v730 = vunpack.c.l.b16 %v179
    %v731 = vunpack.c.h.b16 %v179
    %v732 = vunpack.c.l.b16 %v180
    %v733 = vunpack.c.h.b16 %v180
    %v734 = vunpack.c.l.b16 %v181
    %v735 = vunpack.c.h.b16 %v181
    %v736 = vunpack.c.l.b16 %v182
    %v737 = vunpack.c.h.b16 %v182
    %v738 = vunpack.c.l.b16 %v183
    %v739 = vunpack.c.h.b16 %v183
    %v740 = vunpack.c.l.b16 %v184
    %v741 = vunpack.c.h.b16 %v184
    %v742 = vunpack.c.l.b16 %v185
    %v743 = vunpack.c.h.b16 %v185
    %v744 = vunpack.c.l.b16 %v186
    %v745 = vunpack.c.h.b16 %v186
    %v746 = vunpack.c.l.b16 %v187
    %v747 = vunpack.c.h.b16 %v187
    %v748 = vunpack.c.l.b16 %v188
    %v749 = vunpack.c.h.b16 %v188
    %v750 = vunpack.c.l.b16 %v189
    %v751 = vunpack.c.h.b16 %v189
    %v752 = vunpack.c.l.b16 %v190
    %v753 = vunpack.c.h.b16 %v190
    %v754 = vunpack.c.l.b16 %v191
    %v755 = vunpack.c.h.b16 %v191
    %v756 = vunpack.c.l.b16 %v192
    %v757 = vunpack.c.h.b16 %v192
    %v758 = vunpack.c.l.b16 %v193
    %v759 = vunpack.c.h.b16 %v193
    %v760 = vunpack.c.l.b16 %v194
    %v761 = vunpack.c.h.b16 %v194
    %v762 = vunpack.c.l.b16 %v195
    %v763 = vunpack.c.h.b16 %v195
    %v764 = vunpack.c.l.b16 %v196
    %v765 = vunpack.c.h.b16 %v196
    %v766 = vunpack.c.l.b16 %v197
    %v767 = vunpack.c.h.b16 %v197
    %v768 = vunpack.c.l.b16 %v198
    %v769 = vunpack.c.h.b16 %v198
    %v770 = vunpack.c.l.b16 %v199
    %v771 = vunpack.c.h.b16 %v199
    %v772 = vunpack.c.l.b16 %v200
    %v773 = vunpack.c.h.b16 %v200
    %v774 = vunpack.c.l.b16 %v201
    %v775 = vunpack.c.h.b16 %v201
    %v776 = vunpack.c.l.b16 %v202
    %v777 = vunpack.c.h.b16 %v202
    %v778 = vunpack.c.l.b16 %v203
    %v779 = vunpack.c.h.b16 %v203
    %v780 = vunpack.c.l.b16 %v204
    %v781 = vunpack.c.h.b16 %v204
    %v782 = vunpack.c.l.b16 %v205
    %v783 = vunpack.c.h.b16 %v205
    %v784 = vunpack.c.l.b16 %v206
    %v785 = vunpack.c.h.b16 %v206
    %v786 = vunpack.c.l.b16 %v207
    %v787 = vunpack.c.h.b16 %v207
    %v788 = vunpack.c.l.b16 %v208
    %v789 = vunpack.c.h.b16 %v208
    %v790 = vunpack.c.l.b16 %v209
    %v791 = vunpack.c.h.b16 %v209
    %v792 = vunpack.c.l.b16 %v210
    %v793 = vunpack.c.h.b16 %v210
    %v794 = vunpack.c.l.b16 %v211
    %v795 = vunpack.c.h.b16 %v211
    %v796 = vunpack.c.l.b16 %v212
    %v797 = vunpack.c.h.b16 %v212
    %v798 = vunpack.c.l.b16 %v213
    %v799 = vunpack.c.h.b16 %v213
    %v800 = vunpack.c.l.b16 %v214
    %v801 = vunpack.c.h.b16 %v214
    %v802 = vunpack.c.l.b16 %v215
    %v803 = vunpack.c.h.b16 %v215
    %v804 = vunpack.c.l.b16 %v216
    %v805 = vunpack.c.h.b16 %v216
    %v806 = vunpack.c.l.b16 %v217
    %v807 = vunpack.c.h.b16 %v217
    %v808 = vunpack.c.l.b16 %v218
    %v809 = vunpack.c.h.b16 %v218
    %v810 = vunpack.c.l.b16 %v219
    %v811 = vunpack.c.h.b16 %v219
    %v812 = vunpack.c.l.b16 %v220
    %v813 = vunpack.c.h.b16 %v220
    %v814 = vunpack.c.l.b16 %v221
    %v815 = vunpack.c.h.b16 %v221
    %v816 = vunpack.c.l.b16 %v222
    %v817 = vunpack.c.h.b16 %v222
    %v818 = vunpack.c.l.b16 %v223
    %v819 = vunpack.c.h.b16 %v223
    %v820 = vunpack.c.l.b16 %v224
    %v821 = vunpack.c.h.b16 %v224
    %v822 = vunpack.c.l.b16 %v225
    %v823 = vunpack.c.h.b16 %v225
    %v824 = vunpack.c.l.b16 %v226
    %v825 = vunpack.c.h.b16 %v226
    %v826 = vunpack.c.l.b16 %v227
    %v827 = vunpack.c.h.b16 %v227
    %v828 = vunpack.c.l.b16 %v228
    %v829 = vunpack.c.h.b16 %v228
    %v830 = vunpack.c.l.b16 %v229
    %v831 = vunpack.c.h.b16 %v229
    %v832 = vunpack.c.l.b16 %v230
    %v833 = vunpack.c.h.b16 %v230
    %v834 = vunpack.c.l.b16 %v231
    %v835 = vunpack.c.h.b16 %v231
    %v836 = vunpack.c.l.b16 %v232
    %v837 = vunpack.c.h.b16 %v232
    %v838 = vunpack.c.l.b16 %v233
    %v839 = vunpack.c.h.b16 %v233
    %v840 = vunpack.c.l.b16 %v234
    %v841 = vunpack.c.h.b16 %v234
    %v842 = vunpack.c.l.b16 %v235
    %v843 = vunpack.c.h.b16 %v235
    %v844 = vunpack.c.l.b16 %v236
    %v845 = vunpack.c.h.b16 %v236
    %v846 = vunpack.c.l.b16 %v237
    %v847 = vunpack.c.h.b16 %v237
    %v848 = vpack.c.b16 %v460, %v456
    %v849 = vpack.c.b16 %v461, %v457
    %v850 = vpack.c.b16 %v462, %v458
    %v851 = vpack.c.b16 %v463, %v459
    %v852 = vpack.c.b16 %v468, %v464
    %v853 = vpack.c.b16 %v469, %v465
    %v854 = vpack.c.b16 %v470, %v466
    %v855 = vpack.c.b16 %v471, %v467
    %v856 = vpack.c.b16 %v476, %v472
    %v857 = vpack.c.b16 %v477, %v473
    %v858 = vpack.c.b16 %v478, %v474
    %v859 = vpack.c.b16 %v479, %v475
    %v860 = vpack.c.b16 %v484, %v480
    %v861 = vpack.c.b16 %v485, %v481
    %v862 = vpack.c.b16 %v486, %v482
    %v863 = vpack.c.b16 %v487, %v483
    %v864 = vpack.c.b16 %v492, %v488
    %v865 = vpack.c.b16 %v493, %v489
    %v866 = vpack.c.b16 %v494, %v490
    %v867 = vpack.c.b16 %v495, %v491
    %v868 = vpack.c.b16 %v500, %v496
    %v869 = vpack.c.b16 %v501, %v497
    %v870 = vpack.c.b16 %v502, %v498
    %v871 = vpack.c.b16 %v503, %v499
    %v872 = vpack.c.b16 %v508, %v504
    %v873 = vpack.c.b16 %v509, %v505
    %v874 = vpack.c.b16 %v510, %v506
    %v875 = vpack.c.b16 %v511, %v507
    %v876 = vpack.c.b16 %v516, %v512
    %v877 = vpack.c.b16 %v517, %v513
    %v878 = vpack.c.b16 %v518, %v514
    %v879 = vpack.c.b16 %v519, %v515
    %v880 = vpack.c.b16 %v524, %v520
    %v881 = vpack.c.b16 %v525, %v521
    %v882 = vpack.c.b16 %v526, %v522
    %v883 = vpack.c.b16 %v527, %v523
    %v884 = vpack.c.b16 %v532, %v528
    %v885 = vpack.c.b16 %v533, %v529
    %v886 = vpack.c.b16 %v534, %v530
    %v887 = vpack.c.b16 %v535, %v531
    %v888 = vpack.c.b16 %v540, %v536
    %v889 = vpack.c.b16 %v541, %v537
    %v890 = vpack.c.b16 %v542, %v538
    %v891 = vpack.c.b16 %v543, %v539
    %v892 = vpack.c.b16 %v548, %v544
    %v893 = vpack.c.b16 %v549, %v545
    %v894 = vpack.c.b16 %v550, %v546
    %v895 = vpack.c.b16 %v551, %v547
    %v896 = vpack.c.b16 %v556, %v552
    %v897 = vpack.c.b16 %v557, %v553
    %v898 = vpack.c.b16 %v558, %v554
    %v899 = vpack.c.b16 %v559, %v555
    %v900 = vpack.c.b16 %v564, %v560
    %v901 = vpack.c.b16 %v565, %v561
    %v902 = vpack.c.b16 %v566, %v562
    %v903 = vpack.c.b16 %v567, %v563
    %v904 = vpack.c.b16 %v572, %v568
    %v905 = vpack.c.b16 %v573, %v569
    %v906 = vpack.c.b16 %v574, %v570
    %v907 = vpack.c.b16 %v575, %v571
    %v908 = vpack.c.b16 %v580, %v576
    %v909 = vpack.c.b16 %v581, %v577
    %v910 = vpack.c.b16 %v582, %v578
    %v911 = vpack.c.b16 %v583, %v579
    %v912 = vpack.c.b16 %v588, %v584
    %v913 = vpack.c.b16 %v589, %v585
    %v914 = vpack.c.b16 %v590, %v586
    %v915 = vpack.c.b16 %v591, %v587
    %v916 = vpack.c.b16 %v596, %v592
    %v917 = vpack.c.b16 %v597, %v593
    %v918 = vpack.c.b16 %v598, %v594
    %v919 = vpack.c.b16 %v599, %v595
    %v920 = vpack.c.b16 %v604, %v600
    %v921 = vpack.c.b16 %v605, %v601
    %v922 = vpack.c.b16 %v606, %v602
    %v923 = vpack.c.b16 %v607, %v603
    %v924 = vpack.c.b16 %v612, %v608
    %v925 = vpack.c.b16 %v613, %v609
    %v926 = vpack.c.b16 %v614, %v610
    %v927 = vpack.c.b16 %v615, %v611
    %v928 = vpack.c.b16 %v620, %v616
    %v929 = vpack.c.b16 %v621, %v617
    %v930 = vpack.c.b16 %v622, %v618
    %v931 = vpack.c.b16 %v623, %v619
    %v932 = vpack.c.b16 %v628, %v624
    %v933 = vpack.c.b16 %v629, %v625
    %v934 = vpack.c.b16 %v630, %v626
    %v935 = vpack.c.b16 %v631, %v627
    %v936 = vpack.c.b16 %v636, %v632
    %v937 = vpack.c.b16 %v637, %v633
    %v938 = vpack.c.b16 %v638, %v634
    %v939 = vpack.c.b16 %v639, %v635
    %v940 = vpack.c.b16 %v644, %v640
    %v941 = vpack.c.b16 %v645, %v641
    %v942 = vpack.c.b16 %v646, %v642
    %v943 = vpack.c.b16 %v647, %v643
    %v944 = vpack.c.b16 %v652, %v648
    %v945 = vpack.c.b16 %v653, %v649
    %v946 = vpack.c.b16 %v654, %v650
    %v947 = vpack.c.b16 %v655, %v651
    %v948 = vpack.c.b16 %v660, %v656
    %v949 = vpack.c.b16 %v661, %v657
    %v950 = vpack.c.b16 %v662, %v658
    %v951 = vpack.c.b16 %v663, %v659
    %v952 = vpack.c.b16 %v668, %v664
    %v953 = vpack.c.b16 %v669, %v665
    %v954 = vpack.c.b16 %v670, %v666
    %v955 = vpack.c.b16 %v671, %v667
    %v956 = vpack.c.b16 %v676, %v672
    %v957 = vpack.c.b16 %v677, %v673
    %v958 = vpack.c.b16 %v678, %v674
    %v959 = vpack.c.b16 %v679, %v675
    %v960 = vpack.c.b16 %v684, %v680
    %v961 = vpack.c.b16 %v685, %v681
    %v962 = vpack.c.b16 %v686, %v682
    %v963 = vpack.c.b16 %v687, %v683
    %v964 = vpack.c.b16 %v692, %v688
    %v965 = vpack.c.b16 %v693, %v689
    %v966 = vpack.c.b16 %v694, %v690
    %v967 = vpack.c.b16 %v695, %v691
    %v968 = vpack.c.b16 %v700, %v696
    %v969 = vpack.c.b16 %v701, %v697
    %v970 = vpack.c.b16 %v702, %v698
    %v971 = vpack.c.b16 %v703, %v699
    %v972 = vpack.c.b16 %v708, %v704
    %v973 = vpack.c.b16 %v709, %v705
    %v974 = vpack.c.b16 %v710, %v706
    %v975 = vpack.c.b16 %v711, %v707
    %v976 = vpack.c.b16 %v716, %v712
    %v977 = vpack.c.b16 %v717, %v713
    %v978 = vpack.c.b16 %v718, %v714
    %v979 = vpack.c.b16 %v719, %v715
    %v980 = vpack.c.b16 %v724, %v720
    %v981 = vpack.c.b16 %v725, %v721
    %v982 = vpack.c.b16 %v726, %v722
    %v983 = vpack.c.b16 %v727, %v723
    %v984 = vpack.c.b16 %v732, %v728
    %v985 = vpack.c.b16 %v733, %v729
    %v986 = vpack.c.b16 %v734, %v730
    %v987 = vpack.c.b16 %v735, %v731
    %v988 = vpack.c.b16 %v740, %v736
    %v989 = vpack.c.b16 %v741, %v737
    %v990 = vpack.c.b16 %v742, %v738
    %v991 = vpack.c.b16 %v743, %v739
    %v992 = vpack.c.b16 %v748, %v744
    %v993 = vpack.c.b16 %v749, %v745
    %v994 = vpack.c.b16 %v750, %v746
    %v995 = vpack.c.b16 %v751, %v747
    %v996 = vpack.c.b16 %v756, %v752
    %v997 = vpack.c.b16 %v757, %v753
    %v998 = vpack.c.b16 %v758, %v754
    %v999 = vpack.c.b16 %v759, %v755
    %v1000 = vpack.c.b16 %v764, %v760
    %v1001 = vpack.c.b16 %v765, %v761
    %v1002 = vpack.c.b16 %v766, %v762
    %v1003 = vpack.c.b16 %v767, %v763
    %v1004 = vpack.c.b16 %v772, %v768
    %v1005 = vpack.c.b16 %v773, %v769
    %v1006 = vpack.c.b16 %v774, %v770
    %v1007 = vpack.c.b16 %v775, %v771
    %v1008 = vpack.c.b16 %v780, %v776
    %v1009 = vpack.c.b16 %v781, %v777
    %v1010 = vpack.c.b16 %v782, %v778
    %v1011 = vpack.c.b16 %v783, %v779
    %v1012 = vpack.c.b16 %v788, %v784
    %v1013 = vpack.c.b16 %v789, %v785
    %v1014 = vpack.c.b16 %v790, %v786
    %v1015 = vpack.c.b16 %v791, %v787
    %v1016 = vpack.c.b16 %v796, %v792
    %v1017 = vpack.c.b16 %v797, %v793
    %v1018 = vpack.c.b16 %v798, %v794
    %v1019 = vpack.c.b16 %v799, %v795
    %v1020 = vpack.c.b16 %v804, %v800
    %v1021 = vpack.c.b16 %v805, %v801
    %v1022 = vpack.c.b16 %v806, %v802
    %v1023 = vpack.c.b16 %v807, %v803
    %v1024 = vpack.c.b16 %v812, %v808
    %v1025 = vpack.c.b16 %v813, %v809
    %v1026 = vpack.c.b16 %v814, %v810
    %v1027 = vpack.c.b16 %v815, %v811
    %v1028 = vpack.c.b16 %v820, %v816
    %v1029 = vpack.c.b16 %v821, %v817
    %v1030 = vpack.c.b16 %v822, %v818
    %v1031 = vpack.c.b16 %v823, %v819
    %v1032 = vpack.c.b16 %v828, %v824
    %v1033 = vpack.c.b16 %v829, %v825
    %v1034 = vpack.c.b16 %v830, %v826
    %v1035 = vpack.c.b16 %v831, %v827
    %v1036 = vpack.c.b16 %v836, %v832
    %v1037 = vpack.c.b16 %v837, %v833
    %v1038 = vpack.c.b16 %v838, %v834
    %v1039 = vpack.c.b16 %v839, %v835
    %v1040 = vpack.c.b16 %v844, %v840
    %v1041 = vpack.c.b16 %v845, %v841
    %v1042 = vpack.c.b16 %v846, %v842
    %v1043 = vpack.c.b16 %v847, %v843
    %vm1240 = vcmask 130048
    %v1242 = vsel %vm1240, %v41, 0
    %1244 = vmatprep.subr.bf16.mxu0 %v849
    %1245 = vmatpush1.bf16.msra.mxu0 %v848
    %1246 = vmatprep.subr.bf16.mxu0 %v853
    %1247 = vmatpush1.bf16.msra.mxu0 %v852
    %1248 = vmatprep.subr.bf16.mxu0 %v857
    %1249 = vmatpush1.bf16.msra.mxu0 %v856
    %1250 = vmatprep.subr.bf16.mxu0 %v861
    %1251 = vmatpush1.bf16.msra.mxu0 %v860
    %1252 = vmatprep.subr.bf16.mxu0 %v865
    %1253 = vmatpush1.bf16.msra.mxu0 %v864
    %1254 = vmatprep.subr.bf16.mxu0 %v869
    %1255 = vmatpush1.bf16.msra.mxu0 %v868
    %1256 = vmatprep.subr.bf16.mxu0 %v873
    %1257 = vmatpush1.bf16.msra.mxu0 %v872
    %1258 = vmatprep.subr.bf16.mxu0 %v877
    %1259 = vmatpush1.bf16.msra.mxu0 %v876
    %1260 = vmatprep.subr.bf16.mxu0 %v881
    %1261 = vmatpush1.bf16.msra.mxu0 %v880
    %1262 = vmatprep.subr.bf16.mxu0 %v885
    %1263 = vmatpush1.bf16.msra.mxu0 %v884
    %1264 = vmatprep.subr.bf16.mxu0 %v889
    %1265 = vmatpush1.bf16.msra.mxu0 %v888
    %1266 = vmatprep.subr.bf16.mxu0 %v893
    %1267 = vmatpush1.bf16.msra.mxu0 %v892
    %1268 = vmatprep.subr.bf16.mxu0 %v897
    %1269 = vmatpush1.bf16.msra.mxu0 %v896
    %1270 = vmatprep.subr.bf16.mxu0 %v901
    %1271 = vmatpush1.bf16.msra.mxu0 %v900
    %1272 = vmatprep.subr.bf16.mxu0 %v905
    %1273 = vmatpush1.bf16.msra.mxu0 %v904
    %1274 = vmatprep.subr.bf16.mxu0 %v909
    %1275 = vmatpush1.bf16.msra.mxu0 %v908
    %1276 = vmatprep.mubr.bf16.mxu0 %v36
    %1277 = vmatmul.mubr.bf16.gmra.mrb[0].mxu0 %v35
    %v1278 = vpop.f32.mrb[0].mxu0
    %v1279 = vadd.f32 %v243, %v1278
    %v1280 = vpop.f32.mrb[0].mxu0
    %v1281 = vadd.f32 %v247, %v1280
    %v1282 = vpop.f32.mrb[0].mxu0
    %v1283 = vpop.f32.mrb[0].mxu0
    %1284 = vdwg.mxu0
    %1285 = vmatprep.subr.bf16.mxu0 %v913
    %1286 = vmatpush1.bf16.msra.mxu0 %v912
    %1287 = vmatprep.subr.bf16.mxu0 %v917
    %1288 = vmatpush1.bf16.msra.mxu0 %v916
    %1289 = vmatprep.subr.bf16.mxu0 %v921
    %1290 = vmatpush1.bf16.msra.mxu0 %v920
    %1291 = vmatprep.subr.bf16.mxu0 %v925
    %1292 = vmatpush1.bf16.msra.mxu0 %v924
    %1293 = vmatprep.subr.bf16.mxu0 %v929
    %1294 = vmatpush1.bf16.msra.mxu0 %v928
    %1295 = vmatprep.subr.bf16.mxu0 %v933
    %1296 = vmatpush1.bf16.msra.mxu0 %v932
    %1297 = vmatprep.subr.bf16.mxu0 %v937
    %1298 = vmatpush1.bf16.msra.mxu0 %v936
    %1299 = vmatprep.subr.bf16.mxu0 %v941
    %1300 = vmatpush1.bf16.msra.mxu0 %v940
    %1301 = vmatprep.subr.bf16.mxu0 %v945
    %1302 = vmatpush1.bf16.msra.mxu0 %v944
    %1303 = vmatprep.subr.bf16.mxu0 %v949
    %1304 = vmatpush1.bf16.msra.mxu0 %v948
    %1305 = vmatprep.subr.bf16.mxu0 %v953
    %1306 = vmatpush1.bf16.msra.mxu0 %v952
    %1307 = vmatprep.subr.bf16.mxu0 %v957
    %1308 = vmatpush1.bf16.msra.mxu0 %v956
    %1309 = vmatprep.subr.bf16.mxu0 %v961
    %1310 = vmatpush1.bf16.msra.mxu0 %v960
    %1311 = vmatprep.subr.bf16.mxu0 %v965
    %1312 = vmatpush1.bf16.msra.mxu0 %v964
    %1313 = vmatprep.subr.bf16.mxu0 %v969
    %1314 = vmatpush1.bf16.msra.mxu0 %v968
    %1315 = vmatprep.subr.bf16.mxu0 %v973
    %1316 = vmatpush1.bf16.msra.mxu0 %v972
    %1317 = vmatprep.mubr.bf16.mxu0 %v38
    %1318 = vmatmul.mubr.bf16.gmra.mrb[0].mxu0 %v37
    %v1319 = vpop.f32.mrb[0].mxu0
    %v1320 = vadd.f32 %v1279, %v1319
    %v1321 = vpop.f32.mrb[0].mxu0
    %v1322 = vadd.f32 %v1281, %v1321
    %v1323 = vpop.f32.mrb[0].mxu0
    %v1324 = vpop.f32.mrb[0].mxu0
    %1325 = vdwg.mxu0
    %1326 = vmatprep.subr.bf16.mxu0 %v977
    %1327 = vmatpush1.bf16.msra.mxu0 %v976
    %1328 = vmatprep.subr.bf16.mxu0 %v981
    %1329 = vmatpush1.bf16.msra.mxu0 %v980
    %1330 = vmatprep.subr.bf16.mxu0 %v985
    %1331 = vmatpush1.bf16.msra.mxu0 %v984
    %1332 = vmatprep.subr.bf16.mxu0 %v989
    %1333 = vmatpush1.bf16.msra.mxu0 %v988
    %1334 = vmatprep.subr.bf16.mxu0 %v993
    %1335 = vmatpush1.bf16.msra.mxu0 %v992
    %1336 = vmatprep.subr.bf16.mxu0 %v997
    %1337 = vmatpush1.bf16.msra.mxu0 %v996
    %1338 = vmatprep.subr.bf16.mxu0 %v1001
    %1339 = vmatpush1.bf16.msra.mxu0 %v1000
    %1340 = vmatprep.subr.bf16.mxu0 %v1005
    %1341 = vmatpush1.bf16.msra.mxu0 %v1004
    %1342 = vmatprep.subr.bf16.mxu0 %v1009
    %1343 = vmatpush1.bf16.msra.mxu0 %v1008
    %1344 = vmatprep.subr.bf16.mxu0 %v1013
    %1345 = vmatpush1.bf16.msra.mxu0 %v1012
    %1346 = vmatprep.subr.bf16.mxu0 %v1017
    %1347 = vmatpush1.bf16.msra.mxu0 %v1016
    %1348 = vmatprep.subr.bf16.mxu0 %v1021
    %1349 = vmatpush1.bf16.msra.mxu0 %v1020
    %1350 = vmatprep.subr.bf16.mxu0 %v1025
    %1351 = vmatpush1.bf16.msra.mxu0 %v1024
    %1352 = vmatprep.subr.bf16.mxu0 %v1029
    %1353 = vmatpush1.bf16.msra.mxu0 %v1028
    %1354 = vmatprep.subr.bf16.mxu0 %v1033
    %1355 = vmatpush1.bf16.msra.mxu0 %v1032
    %1356 = vmatprep.subr.bf16.mxu0 %v1037
    %1357 = vmatpush1.bf16.msra.mxu0 %v1036
    %1358 = vmatprep.mubr.bf16.mxu0 %v40
    %1359 = vmatmul.mubr.bf16.gmra.mrb[0].mxu0 %v39
    %v1360 = vpop.f32.mrb[0].mxu0
    %v1361 = vadd.f32 %v1320, %v1360
    %v1362 = vpop.f32.mrb[0].mxu0
    %v1363 = vadd.f32 %v1322, %v1362
    %v1364 = vpop.f32.mrb[0].mxu0
    %v1365 = vpop.f32.mrb[0].mxu0
    %1366 = vdwg.mxu0
    %1367 = vmatprep.subr.bf16.mxu0 %v1041
    %1368 = vmatpush1.bf16.msra.mxu0 %v1040
    %1369 = vmatprep.subr.bf16.mxu0 0
    %1370 = vmatpush1.bf16.msra.mxu0 0
    %1371 = vmatprep.subr.bf16.mxu0 0
    %1372 = vmatpush1.bf16.msra.mxu0 0
    %1373 = vmatprep.subr.bf16.mxu0 0
    %1374 = vmatpush1.bf16.msra.mxu0 0
    %1375 = vmatprep.subr.bf16.mxu0 0
    %1376 = vmatpush1.bf16.msra.mxu0 0
    %1377 = vmatprep.subr.bf16.mxu0 0
    %1378 = vmatpush1.bf16.msra.mxu0 0
    %1379 = vmatprep.subr.bf16.mxu0 0
    %1380 = vmatpush1.bf16.msra.mxu0 0
    %1381 = vmatprep.subr.bf16.mxu0 0
    %1382 = vmatpush1.bf16.msra.mxu0 0
    %1383 = vmatprep.subr.bf16.mxu0 0
    %1384 = vmatpush1.bf16.msra.mxu0 0
    %1385 = vmatprep.subr.bf16.mxu0 0
    %1386 = vmatpush1.bf16.msra.mxu0 0
    %1387 = vmatprep.subr.bf16.mxu0 0
    %1388 = vmatpush1.bf16.msra.mxu0 0
    %1389 = vmatprep.subr.bf16.mxu0 0
    %1390 = vmatpush1.bf16.msra.mxu0 0
    %1391 = vmatprep.subr.bf16.mxu0 0
    %1392 = vmatpush1.bf16.msra.mxu0 0
    %1393 = vmatprep.subr.bf16.mxu0 0
    %1394 = vmatpush1.bf16.msra.mxu0 0
    %1395 = vmatprep.subr.bf16.mxu0 0
    %1396 = vmatpush1.bf16.msra.mxu0 0
    %1397 = vmatprep.subr.bf16.mxu0 0
    %1398 = vmatpush1.bf16.msra.mxu0 0
    %1399 = vmatprep.mubr.bf16.mxu0 0
    %1400 = vmatmul.mubr.bf16.gmra.mrb[0].mxu0 %v1242
    %v1401 = vpop.f32.mrb[0].mxu0
    %v1402 = vadd.f32 %v1361, %v1401
    %v1403 = vpop.f32.mrb[0].mxu0
    %v1404 = vadd.f32 %v1363, %v1403
    %v1405 = vpop.f32.mrb[0].mxu0
    %v1406 = vpop.f32.mrb[0].mxu0
    %1407 = vdwg.mxu0
    %1408 = vmatprep.subr.bf16.mxu0 %v851
    %1409 = vmatpush1.bf16.msra.mxu0 %v850
    %1410 = vmatprep.subr.bf16.mxu0 %v855
    %1411 = vmatpush1.bf16.msra.mxu0 %v854
    %1412 = vmatprep.subr.bf16.mxu0 %v859
    %1413 = vmatpush1.bf16.msra.mxu0 %v858
    %1414 = vmatprep.subr.bf16.mxu0 %v863
    %1415 = vmatpush1.bf16.msra.mxu0 %v862
    %1416 = vmatprep.subr.bf16.mxu0 %v867
    %1417 = vmatpush1.bf16.msra.mxu0 %v866
    %1418 = vmatprep.subr.bf16.mxu0 %v871
    %1419 = vmatpush1.bf16.msra.mxu0 %v870
    %1420 = vmatprep.subr.bf16.mxu0 %v875
    %1421 = vmatpush1.bf16.msra.mxu0 %v874
    %1422 = vmatprep.subr.bf16.mxu0 %v879
    %1423 = vmatpush1.bf16.msra.mxu0 %v878
    %1424 = vmatprep.subr.bf16.mxu0 %v883
    %1425 = vmatpush1.bf16.msra.mxu0 %v882
    %1426 = vmatprep.subr.bf16.mxu0 %v887
    %1427 = vmatpush1.bf16.msra.mxu0 %v886
    %1428 = vmatprep.subr.bf16.mxu0 %v891
    %1429 = vmatpush1.bf16.msra.mxu0 %v890
    %1430 = vmatprep.subr.bf16.mxu0 %v895
    %1431 = vmatpush1.bf16.msra.mxu0 %v894
    %1432 = vmatprep.subr.bf16.mxu0 %v899
    %1433 = vmatpush1.bf16.msra.mxu0 %v898
    %1434 = vmatprep.subr.bf16.mxu0 %v903
    %1435 = vmatpush1.bf16.msra.mxu0 %v902
    %1436 = vmatprep.subr.bf16.mxu0 %v907
    %1437 = vmatpush1.bf16.msra.mxu0 %v906
    %1438 = vmatprep.subr.bf16.mxu0 %v911
    %1439 = vmatpush1.bf16.msra.mxu0 %v910
    %1440 = vmatprep.mubr.bf16.mxu0 %v36
    %1441 = vmatmul.mubr.bf16.gmra.mrb[0].mxu0 %v35
    %v1442 = vpop.f32.mrb[0].mxu0
    %v1443 = vadd.f32 %v251, %v1442
    %v1444 = vpop.f32.mrb[0].mxu0
    %v1445 = vadd.f32 %v255, %v1444
    %v1446 = vpop.f32.mrb[0].mxu0
    %v1447 = vpop.f32.mrb[0].mxu0
    %1448 = vdwg.mxu0
    %1449 = vmatprep.subr.bf16.mxu0 %v915
    %1450 = vmatpush1.bf16.msra.mxu0 %v914
    %1451 = vmatprep.subr.bf16.mxu0 %v919
    %1452 = vmatpush1.bf16.msra.mxu0 %v918
    %1453 = vmatprep.subr.bf16.mxu0 %v923
    %1454 = vmatpush1.bf16.msra.mxu0 %v922
    %1455 = vmatprep.subr.bf16.mxu0 %v927
    %1456 = vmatpush1.bf16.msra.mxu0 %v926
    %1457 = vmatprep.subr.bf16.mxu0 %v931
    %1458 = vmatpush1.bf16.msra.mxu0 %v930
    %1459 = vmatprep.subr.bf16.mxu0 %v935
    %1460 = vmatpush1.bf16.msra.mxu0 %v934
    %1461 = vmatprep.subr.bf16.mxu0 %v939
    %1462 = vmatpush1.bf16.msra.mxu0 %v938
    %1463 = vmatprep.subr.bf16.mxu0 %v943
    %1464 = vmatpush1.bf16.msra.mxu0 %v942
    %1465 = vmatprep.subr.bf16.mxu0 %v947
    %1466 = vmatpush1.bf16.msra.mxu0 %v946
    %1467 = vmatprep.subr.bf16.mxu0 %v951
    %1468 = vmatpush1.bf16.msra.mxu0 %v950
    %1469 = vmatprep.subr.bf16.mxu0 %v955
    %1470 = vmatpush1.bf16.msra.mxu0 %v954
    %1471 = vmatprep.subr.bf16.mxu0 %v959
    %1472 = vmatpush1.bf16.msra.mxu0 %v958
    %1473 = vmatprep.subr.bf16.mxu0 %v963
    %1474 = vmatpush1.bf16.msra.mxu0 %v962
    %1475 = vmatprep.subr.bf16.mxu0 %v967
    %1476 = vmatpush1.bf16.msra.mxu0 %v966
    %1477 = vmatprep.subr.bf16.mxu0 %v971
    %1478 = vmatpush1.bf16.msra.mxu0 %v970
    %1479 = vmatprep.subr.bf16.mxu0 %v975
    %1480 = vmatpush1.bf16.msra.mxu0 %v974
    %1481 = vmatprep.mubr.bf16.mxu0 %v38
    %1482 = vmatmul.mubr.bf16.gmra.mrb[0].mxu0 %v37
    %v1483 = vpop.f32.mrb[0].mxu0
    %v1484 = vadd.f32 %v1443, %v1483
    %v1485 = vpop.f32.mrb[0].mxu0
    %v1486 = vadd.f32 %v1445, %v1485
    %v1487 = vpop.f32.mrb[0].mxu0
    %v1488 = vpop.f32.mrb[0].mxu0
    %1489 = vdwg.mxu0
    %1490 = vmatprep.subr.bf16.mxu0 %v979
    %1491 = vmatpush1.bf16.msra.mxu0 %v978
    %1492 = vmatprep.subr.bf16.mxu0 %v983
    %1493 = vmatpush1.bf16.msra.mxu0 %v982
    %1494 = vmatprep.subr.bf16.mxu0 %v987
    %1495 = vmatpush1.bf16.msra.mxu0 %v986
    %1496 = vmatprep.subr.bf16.mxu0 %v991
    %1497 = vmatpush1.bf16.msra.mxu0 %v990
    %1498 = vmatprep.subr.bf16.mxu0 %v995
    %1499 = vmatpush1.bf16.msra.mxu0 %v994
    %1500 = vmatprep.subr.bf16.mxu0 %v999
    %1501 = vmatpush1.bf16.msra.mxu0 %v998
    %1502 = vmatprep.subr.bf16.mxu0 %v1003
    %1503 = vmatpush1.bf16.msra.mxu0 %v1002
    %1504 = vmatprep.subr.bf16.mxu0 %v1007
    %1505 = vmatpush1.bf16.msra.mxu0 %v1006
    %1506 = vmatprep.subr.bf16.mxu0 %v1011
    %1507 = vmatpush1.bf16.msra.mxu0 %v1010
    %1508 = vmatprep.subr.bf16.mxu0 %v1015
    %1509 = vmatpush1.bf16.msra.mxu0 %v1014
    %1510 = vmatprep.subr.bf16.mxu0 %v1019
    %1511 = vmatpush1.bf16.msra.mxu0 %v1018
    %1512 = vmatprep.subr.bf16.mxu0 %v1023
    %1513 = vmatpush1.bf16.msra.mxu0 %v1022
    %1514 = vmatprep.subr.bf16.mxu0 %v1027
    %1515 = vmatpush1.bf16.msra.mxu0 %v1026
    %1516 = vmatprep.subr.bf16.mxu0 %v1031
    %1517 = vmatpush1.bf16.msra.mxu0 %v1030
    %1518 = vmatprep.subr.bf16.mxu0 %v1035
    %1519 = vmatpush1.bf16.msra.mxu0 %v1034
    %1520 = vmatprep.subr.bf16.mxu0 %v1039
    %1521 = vmatpush1.bf16.msra.mxu0 %v1038
    %1522 = vmatprep.mubr.bf16.mxu0 %v40
    %1523 = vmatmul.mubr.bf16.gmra.mrb[0].mxu0 %v39
    %v1524 = vpop.f32.mrb[0].mxu0
    %v1525 = vadd.f32 %v1484, %v1524
    %v1526 = vpop.f32.mrb[0].mxu0
    %v1527 = vadd.f32 %v1486, %v1526
    %v1528 = vpop.f32.mrb[0].mxu0
    %v1529 = vpop.f32.mrb[0].mxu0
    %1530 = vdwg.mxu0
    %1531 = vmatprep.subr.bf16.mxu0 %v1043
    %1532 = vmatpush1.bf16.msra.mxu0 %v1042
    %1533 = vmatprep.subr.bf16.mxu0 0
    %1534 = vmatpush1.bf16.msra.mxu0 0
    %1535 = vmatprep.subr.bf16.mxu0 0
    %1536 = vmatpush1.bf16.msra.mxu0 0
    %1537 = vmatprep.subr.bf16.mxu0 0
    %1538 = vmatpush1.bf16.msra.mxu0 0
    %1539 = vmatprep.subr.bf16.mxu0 0
    %1540 = vmatpush1.bf16.msra.mxu0 0
    %1541 = vmatprep.subr.bf16.mxu0 0
    %1542 = vmatpush1.bf16.msra.mxu0 0
    %1543 = vmatprep.subr.bf16.mxu0 0
    %1544 = vmatpush1.bf16.msra.mxu0 0
    %1545 = vmatprep.subr.bf16.mxu0 0
    %1546 = vmatpush1.bf16.msra.mxu0 0
    %1547 = vmatprep.subr.bf16.mxu0 0
    %1548 = vmatpush1.bf16.msra.mxu0 0
    %1549 = vmatprep.subr.bf16.mxu0 0
    %1550 = vmatpush1.bf16.msra.mxu0 0
    %1551 = vmatprep.subr.bf16.mxu0 0
    %1552 = vmatpush1.bf16.msra.mxu0 0
    %1553 = vmatprep.subr.bf16.mxu0 0
    %1554 = vmatpush1.bf16.msra.mxu0 0
    %1555 = vmatprep.subr.bf16.mxu0 0
    %1556 = vmatpush1.bf16.msra.mxu0 0
    %1557 = vmatprep.subr.bf16.mxu0 0
    %1558 = vmatpush1.bf16.msra.mxu0 0
    %1559 = vmatprep.subr.bf16.mxu0 0
    %1560 = vmatpush1.bf16.msra.mxu0 0
    %1561 = vmatprep.subr.bf16.mxu0 0
    %1562 = vmatpush1.bf16.msra.mxu0 0
    %1563 = vmatprep.mubr.bf16.mxu0 0
    %1564 = vmatmul.mubr.bf16.gmra.mrb[0].mxu0 %v1242
    %v1565 = vpop.f32.mrb[0].mxu0
    %v1566 = vadd.f32 %v1525, %v1565
    %v1567 = vpop.f32.mrb[0].mxu0
    %v1568 = vadd.f32 %v1527, %v1567
    %v1569 = vpop.f32.mrb[0].mxu0
    %v1570 = vpop.f32.mrb[0].mxu0
    %1571 = vdwg.mxu0
    %v1572 = vmax.f32 %v1402, 0.0
    %v1573 = vmax.f32 %v1404, 0.0
    %v1574 = vmax.f32 %v1566, 0.0
    %v1575 = vmax.f32 %v1568, 0.0
    %v1576 = vpack.c.bf16 %v1572, %v1572
    %v1577 = vpack.c.bf16 %v1573, %v1573
    %v1578 = vpack.c.bf16 %v1574, %v1574
    %v1579 = vpack.c.bf16 %v1575, %v1575
    %v1580 = vld [vmem:[%s3] sm:$0xf]
    %v1581 = vld [vmem:[%s3 + $0x4] sm:$0xf]
    %v1582 = vld [vmem:[%s3 + $0x8] sm:$0xf]
    %v1583 = vld [vmem:[%s3 + $0xc] sm:$0xf]
    %v1584 = vld [vmem:[%s3 + $0x10] sm:$0xf]
    %v1585 = vld [vmem:[%s3 + $0x14] sm:$0xf]
    %v1586 = vld [vmem:[%s3 + $0x18] sm:$0xf]
    %v1587 = vld [vmem:[%s3 + $0x1c] sm:$0xf]
    %v1588 = vld [vmem:[%s3 + $0x20] sm:$0xf]
    %v1589 = vld [vmem:[%s3 + $0x24] sm:$0xf]
    %v1590 = vld [vmem:[%s3 + $0x28] sm:$0xf]
    %v1591 = vld [vmem:[%s3 + $0x2c] sm:$0xf]
    %v1592 = vld [vmem:[%s3 + $0x30] sm:$0xf]
    %v1593 = vld [vmem:[%s3 + $0x34] sm:$0xf]
    %v1594 = vld [vmem:[%s3 + $0x38] sm:$0xf]
    %v1595 = vld [vmem:[%s3 + $0x3c] sm:$0xf]
    %v1596 = vld [vmem:[%s3 + $0x40] sm:$0xf]
    %v1597 = vld [vmem:[%s3 + $0x44] sm:$0xf]
    %v1598 = vld [vmem:[%s3 + $0x48] sm:$0xf]
    %v1599 = vld [vmem:[%s3 + $0x4c] sm:$0xf]
    %v1600 = vld [vmem:[%s3 + $0x50] sm:$0xf]
    %v1601 = vld [vmem:[%s3 + $0x54] sm:$0xf]
    %v1602 = vld [vmem:[%s3 + $0x58] sm:$0xf]
    %v1603 = vld [vmem:[%s3 + $0x5c] sm:$0xf]
    %v1604 = vld [vmem:[%s3 + $0x60] sm:$0xf]
    %v1605 = vld [vmem:[%s3 + $0x64] sm:$0xf]
    %v1606 = vld [vmem:[%s3 + $0x68] sm:$0xf]
    %v1607 = vld [vmem:[%s3 + $0x6c] sm:$0xf]
    %v1608 = vld [vmem:[%s3 + $0x70] sm:$0xf]
    %v1609 = vld [vmem:[%s3 + $0x74] sm:$0xf]
    %v1610 = vld [vmem:[%s3 + $0x78] sm:$0xf]
    %v1611 = vld [vmem:[%s3 + $0x7c] sm:$0xf]
    %v1612 = vld [vmem:[%s3 + $0x80] sm:$0xf]
    %v1613 = vld [vmem:[%s3 + $0x84] sm:$0xf]
    %v1614 = vld [vmem:[%s3 + $0x88] sm:$0xf]
    %v1615 = vld [vmem:[%s3 + $0x8c] sm:$0xf]
    %v1616 = vld [vmem:[%s3 + $0x90] sm:$0xf]
    %v1617 = vld [vmem:[%s3 + $0x94] sm:$0xf]
    %v1618 = vld [vmem:[%s3 + $0x98] sm:$0xf]
    %v1619 = vld [vmem:[%s3 + $0x9c] sm:$0xf]
    %v1620 = vld [vmem:[%s3 + $0xa0] sm:$0xf]
    %v1621 = vld [vmem:[%s3 + $0xa4] sm:$0xf]
    %v1622 = vld [vmem:[%s3 + $0xa8] sm:$0xf]
    %v1623 = vld [vmem:[%s3 + $0xac] sm:$0xf]
    %v1624 = vld [vmem:[%s3 + $0xb0] sm:$0xf]
    %v1625 = vld [vmem:[%s3 + $0xb4] sm:$0xf]
    %v1626 = vld [vmem:[%s3 + $0xb8] sm:$0xf]
    %v1627 = vld [vmem:[%s3 + $0xbc] sm:$0xf]
    %v1628 = vld [vmem:[%s3 + $0xc0] sm:$0xf]
    %v1629 = vld [vmem:[%s3 + $0xc4] sm:$0xf]
    %v1630 = vld [vmem:[%s3 + $0xc8] sm:$0xf]
    %v1631 = vld [vmem:[%s3 + $0xcc] sm:$0xf]
    %v1632 = vld [vmem:[%s3 + $0xd0] sm:$0xf]
    %v1633 = vld [vmem:[%s3 + $0xd4] sm:$0xf]
    %v1634 = vld [vmem:[%s3 + $0xd8] sm:$0xf]
    %v1635 = vld [vmem:[%s3 + $0xdc] sm:$0xf]
    %v1636 = vld [vmem:[%s3 + $0xe0] sm:$0xf]
    %v1637 = vld [vmem:[%s3 + $0xe4] sm:$0xf]
    %v1638 = vld [vmem:[%s3 + $0xe8] sm:$0xf]
    %v1639 = vld [vmem:[%s3 + $0xec] sm:$0xf]
    %v1640 = vld [vmem:[%s3 + $0xf0] sm:$0xf]
    %v1641 = vld [vmem:[%s3 + $0xf4] sm:$0xf]
    %v1642 = vld [vmem:[%s3 + $0xf8] sm:$0xf]
    %v1643 = vld [vmem:[%s3 + $0xfc] sm:$0xf]
    %v1644 = vld [vmem:[%s4] sm:$0x1]
    %v1646 = vlaneseq
    %v1647 = vshrl.u32 %v1646, 7
    %v1648 = vsub.s32 0, %v1647
    %v1649 = vrot.slane %v1644, %v1648
    %v1715 = vunpack.c.l.b16 %v1580
    %v1716 = vunpack.c.l.b16 %v1581
    %v1717 = vunpack.c.l.b16 %v1582
    %v1718 = vunpack.c.l.b16 %v1583
    %v1719 = vunpack.c.l.b16 %v1584
    %v1720 = vunpack.c.l.b16 %v1585
    %v1721 = vunpack.c.l.b16 %v1586
    %v1722 = vunpack.c.l.b16 %v1587
    %v1723 = vunpack.c.l.b16 %v1588
    %v1724 = vunpack.c.l.b16 %v1589
    %v1725 = vunpack.c.l.b16 %v1590
    %v1726 = vunpack.c.l.b16 %v1591
    %v1727 = vunpack.c.l.b16 %v1592
    %v1728 = vunpack.c.l.b16 %v1593
    %v1729 = vunpack.c.l.b16 %v1594
    %v1730 = vunpack.c.l.b16 %v1595
    %v1731 = vunpack.c.l.b16 %v1596
    %v1732 = vunpack.c.l.b16 %v1597
    %v1733 = vunpack.c.l.b16 %v1598
    %v1734 = vunpack.c.l.b16 %v1599
    %v1735 = vunpack.c.l.b16 %v1600
    %v1736 = vunpack.c.l.b16 %v1601
    %v1737 = vunpack.c.l.b16 %v1602
    %v1738 = vunpack.c.l.b16 %v1603
    %v1739 = vunpack.c.l.b16 %v1604
    %v1740 = vunpack.c.l.b16 %v1605
    %v1741 = vunpack.c.l.b16 %v1606
    %v1742 = vunpack.c.l.b16 %v1607
    %v1743 = vunpack.c.l.b16 %v1608
    %v1744 = vunpack.c.l.b16 %v1609
    %v1745 = vunpack.c.l.b16 %v1610
    %v1746 = vunpack.c.l.b16 %v1611
    %v1747 = vunpack.c.l.b16 %v1612
    %v1748 = vunpack.c.l.b16 %v1613
    %v1749 = vunpack.c.l.b16 %v1614
    %v1750 = vunpack.c.l.b16 %v1615
    %v1751 = vunpack.c.l.b16 %v1616
    %v1752 = vunpack.c.l.b16 %v1617
    %v1753 = vunpack.c.l.b16 %v1618
    %v1754 = vunpack.c.l.b16 %v1619
    %v1755 = vunpack.c.l.b16 %v1620
    %v1756 = vunpack.c.l.b16 %v1621
    %v1757 = vunpack.c.l.b16 %v1622
    %v1758 = vunpack.c.l.b16 %v1623
    %v1759 = vunpack.c.l.b16 %v1624
    %v1760 = vunpack.c.l.b16 %v1625
    %v1761 = vunpack.c.l.b16 %v1626
    %v1762 = vunpack.c.l.b16 %v1627
    %v1763 = vunpack.c.l.b16 %v1628
    %v1764 = vunpack.c.l.b16 %v1629
    %v1765 = vunpack.c.l.b16 %v1630
    %v1766 = vunpack.c.l.b16 %v1631
    %v1767 = vunpack.c.l.b16 %v1632
    %v1768 = vunpack.c.l.b16 %v1633
    %v1769 = vunpack.c.l.b16 %v1634
    %v1770 = vunpack.c.l.b16 %v1635
    %v1771 = vunpack.c.l.b16 %v1636
    %v1772 = vunpack.c.l.b16 %v1637
    %v1773 = vunpack.c.l.b16 %v1638
    %v1774 = vunpack.c.l.b16 %v1639
    %v1775 = vunpack.c.l.b16 %v1640
    %v1776 = vunpack.c.l.b16 %v1641
    %v1777 = vunpack.c.l.b16 %v1642
    %v1778 = vunpack.c.l.b16 %v1643
    %v1779 = vpack.c.b16 %v1716, %v1715
    %v1780 = vpack.c.b16 %v1718, %v1717
    %v1781 = vpack.c.b16 %v1720, %v1719
    %v1782 = vpack.c.b16 %v1722, %v1721
    %v1783 = vpack.c.b16 %v1724, %v1723
    %v1784 = vpack.c.b16 %v1726, %v1725
    %v1785 = vpack.c.b16 %v1728, %v1727
    %v1786 = vpack.c.b16 %v1730, %v1729
    %v1787 = vpack.c.b16 %v1732, %v1731
    %v1788 = vpack.c.b16 %v1734, %v1733
    %v1789 = vpack.c.b16 %v1736, %v1735
    %v1790 = vpack.c.b16 %v1738, %v1737
    %v1791 = vpack.c.b16 %v1740, %v1739
    %v1792 = vpack.c.b16 %v1742, %v1741
    %v1793 = vpack.c.b16 %v1744, %v1743
    %v1794 = vpack.c.b16 %v1746, %v1745
    %v1795 = vpack.c.b16 %v1748, %v1747
    %v1796 = vpack.c.b16 %v1750, %v1749
    %v1797 = vpack.c.b16 %v1752, %v1751
    %v1798 = vpack.c.b16 %v1754, %v1753
    %v1799 = vpack.c.b16 %v1756, %v1755
    %v1800 = vpack.c.b16 %v1758, %v1757
    %v1801 = vpack.c.b16 %v1760, %v1759
    %v1802 = vpack.c.b16 %v1762, %v1761
    %v1803 = vpack.c.b16 %v1764, %v1763
    %v1804 = vpack.c.b16 %v1766, %v1765
    %v1805 = vpack.c.b16 %v1768, %v1767
    %v1806 = vpack.c.b16 %v1770, %v1769
    %v1807 = vpack.c.b16 %v1772, %v1771
    %v1808 = vpack.c.b16 %v1774, %v1773
    %v1809 = vpack.c.b16 %v1776, %v1775
    %v1810 = vpack.c.b16 %v1778, %v1777
    %1843 = vmatprep.subr.bf16.mxu0 0
    %1844 = vmatpush1.bf16.msra.mxu0 %v1779
    %1845 = vmatprep.subr.bf16.mxu0 0
    %1846 = vmatpush1.bf16.msra.mxu0 %v1780
    %1847 = vmatprep.subr.bf16.mxu0 0
    %1848 = vmatpush1.bf16.msra.mxu0 %v1781
    %1849 = vmatprep.subr.bf16.mxu0 0
    %1850 = vmatpush1.bf16.msra.mxu0 %v1782
    %1851 = vmatprep.subr.bf16.mxu0 0
    %1852 = vmatpush1.bf16.msra.mxu0 %v1783
    %1853 = vmatprep.subr.bf16.mxu0 0
    %1854 = vmatpush1.bf16.msra.mxu0 %v1784
    %1855 = vmatprep.subr.bf16.mxu0 0
    %1856 = vmatpush1.bf16.msra.mxu0 %v1785
    %1857 = vmatprep.subr.bf16.mxu0 0
    %1858 = vmatpush1.bf16.msra.mxu0 %v1786
    %1859 = vmatprep.subr.bf16.mxu0 0
    %1860 = vmatpush1.bf16.msra.mxu0 %v1787
    %1861 = vmatprep.subr.bf16.mxu0 0
    %1862 = vmatpush1.bf16.msra.mxu0 %v1788
    %1863 = vmatprep.subr.bf16.mxu0 0
    %1864 = vmatpush1.bf16.msra.mxu0 %v1789
    %1865 = vmatprep.subr.bf16.mxu0 0
    %1866 = vmatpush1.bf16.msra.mxu0 %v1790
    %1867 = vmatprep.subr.bf16.mxu0 0
    %1868 = vmatpush1.bf16.msra.mxu0 %v1791
    %1869 = vmatprep.subr.bf16.mxu0 0
    %1870 = vmatpush1.bf16.msra.mxu0 %v1792
    %1871 = vmatprep.subr.bf16.mxu0 0
    %1872 = vmatpush1.bf16.msra.mxu0 %v1793
    %1873 = vmatprep.subr.bf16.mxu0 0
    %1874 = vmatpush1.bf16.msra.mxu0 %v1794
    %1875 = vmatprep.mubr.bf16.mxu0 %v1577
    %1876 = vmatmul.mubr.bf16.gmra.mrb[0].mxu0 %v1576
    %v1877 = vpop.f32.mrb[0].mxu0
    %v1878 = vadd.f32 %v1649, %v1877
    %v1879 = vpop.f32.mrb[0].mxu0
    %v1880 = vpop.f32.mrb[0].mxu0
    %v1881 = vpop.f32.mrb[0].mxu0
    %1882 = vdwg.mxu0
    %1883 = vmatprep.subr.bf16.mxu0 0
    %1884 = vmatpush1.bf16.msra.mxu0 %v1795
    %1885 = vmatprep.subr.bf16.mxu0 0
    %1886 = vmatpush1.bf16.msra.mxu0 %v1796
    %1887 = vmatprep.subr.bf16.mxu0 0
    %1888 = vmatpush1.bf16.msra.mxu0 %v1797
    %1889 = vmatprep.subr.bf16.mxu0 0
    %1890 = vmatpush1.bf16.msra.mxu0 %v1798
    %1891 = vmatprep.subr.bf16.mxu0 0
    %1892 = vmatpush1.bf16.msra.mxu0 %v1799
    %1893 = vmatprep.subr.bf16.mxu0 0
    %1894 = vmatpush1.bf16.msra.mxu0 %v1800
    %1895 = vmatprep.subr.bf16.mxu0 0
    %1896 = vmatpush1.bf16.msra.mxu0 %v1801
    %1897 = vmatprep.subr.bf16.mxu0 0
    %1898 = vmatpush1.bf16.msra.mxu0 %v1802
    %1899 = vmatprep.subr.bf16.mxu0 0
    %1900 = vmatpush1.bf16.msra.mxu0 %v1803
    %1901 = vmatprep.subr.bf16.mxu0 0
    %1902 = vmatpush1.bf16.msra.mxu0 %v1804
    %1903 = vmatprep.subr.bf16.mxu0 0
    %1904 = vmatpush1.bf16.msra.mxu0 %v1805
    %1905 = vmatprep.subr.bf16.mxu0 0
    %1906 = vmatpush1.bf16.msra.mxu0 %v1806
    %1907 = vmatprep.subr.bf16.mxu0 0
    %1908 = vmatpush1.bf16.msra.mxu0 %v1807
    %1909 = vmatprep.subr.bf16.mxu0 0
    %1910 = vmatpush1.bf16.msra.mxu0 %v1808
    %1911 = vmatprep.subr.bf16.mxu0 0
    %1912 = vmatpush1.bf16.msra.mxu0 %v1809
    %1913 = vmatprep.subr.bf16.mxu0 0
    %1914 = vmatpush1.bf16.msra.mxu0 %v1810
    %1915 = vmatprep.mubr.bf16.mxu0 %v1579
    %1916 = vmatmul.mubr.bf16.gmra.mrb[0].mxu0 %v1578
    %v1917 = vpop.f32.mrb[0].mxu0
    %v1918 = vadd.f32 %v1878, %v1917
    %v1919 = vpop.f32.mrb[0].mxu0
    %v1920 = vpop.f32.mrb[0].mxu0
    %v1921 = vpop.f32.mrb[0].mxu0
    %1922 = vdwg.mxu0
    %v1923 = vmax.f32 %v1918, 0.0
    %v1924 = vpack.c.bf16 %v1923, %v1923
    %v1925 = vld [vmem:[%s5] sm:$0xf]
    %v1926 = vld [vmem:[%s5 + $0x4] sm:$0xf]
    %v1927 = vld [vmem:[%s5 + $0x8] sm:$0xf]
    %v1928 = vld [vmem:[%s5 + $0xc] sm:$0xf]
    %v1929 = vld [vmem:[%s5 + $0x10] sm:$0xf]
    %v1930 = vld [vmem:[%s5 + $0x14] sm:$0xf]
    %v1931 = vld [vmem:[%s5 + $0x18] sm:$0xf]
    %v1932 = vld [vmem:[%s5 + $0x1c] sm:$0xf]
    %v1933 = vld [vmem:[%s5 + $0x20] sm:$0xf]
    %v1934 = vld [vmem:[%s5 + $0x24] sm:$0xf]
    %v1935 = vld [vmem:[%s5 + $0x28] sm:$0xf]
    %v1936 = vld [vmem:[%s5 + $0x2c] sm:$0xf]
    %v1937 = vld [vmem:[%s5 + $0x30] sm:$0xf]
    %v1938 = vld [vmem:[%s5 + $0x34] sm:$0xf]
    %v1939 = vld [vmem:[%s5 + $0x38] sm:$0xf]
    %v1940 = vld [vmem:[%s5 + $0x3c] sm:$0xf]
    %v1941 = vld [vmem:[%s6] sm:$0x1]
    %v1943 = vlaneseq
    %v1944 = vshrl.u32 %v1943, 7
    %v1945 = vsub.s32 0, %v1944
    %v1946 = vrot.slane %v1941, %v1945
    %v1964 = vunpack.c.l.b16 %v1925
    %v1965 = vunpack.c.l.b16 %v1926
    %v1966 = vunpack.c.l.b16 %v1927
    %v1967 = vunpack.c.l.b16 %v1928
    %v1968 = vunpack.c.l.b16 %v1929
    %v1969 = vunpack.c.l.b16 %v1930
    %v1970 = vunpack.c.l.b16 %v1931
    %v1971 = vunpack.c.l.b16 %v1932
    %v1972 = vunpack.c.l.b16 %v1933
    %v1973 = vunpack.c.l.b16 %v1934
    %v1974 = vunpack.c.l.b16 %v1935
    %v1975 = vunpack.c.l.b16 %v1936
    %v1976 = vunpack.c.l.b16 %v1937
    %v1977 = vunpack.c.l.b16 %v1938
    %v1978 = vunpack.c.l.b16 %v1939
    %v1979 = vunpack.c.l.b16 %v1940
    %v1980 = vpack.c.b16 %v1965, %v1964
    %v1981 = vpack.c.b16 %v1967, %v1966
    %v1982 = vpack.c.b16 %v1969, %v1968
    %v1983 = vpack.c.b16 %v1971, %v1970
    %v1984 = vpack.c.b16 %v1973, %v1972
    %v1985 = vpack.c.b16 %v1975, %v1974
    %v1986 = vpack.c.b16 %v1977, %v1976
    %v1987 = vpack.c.b16 %v1979, %v1978
    %1996 = vmatprep.subr.bf16.mxu0 0
    %1997 = vmatpush1.bf16.msra.mxu0 %v1980
    %1998 = vmatprep.subr.bf16.mxu0 0
    %1999 = vmatpush1.bf16.msra.mxu0 %v1981
    %2000 = vmatprep.subr.bf16.mxu0 0
    %2001 = vmatpush1.bf16.msra.mxu0 %v1982
    %2002 = vmatprep.subr.bf16.mxu0 0
    %2003 = vmatpush1.bf16.msra.mxu0 %v1983
    %2004 = vmatprep.subr.bf16.mxu0 0
    %2005 = vmatpush1.bf16.msra.mxu0 %v1984
    %2006 = vmatprep.subr.bf16.mxu0 0
    %2007 = vmatpush1.bf16.msra.mxu0 %v1985
    %2008 = vmatprep.subr.bf16.mxu0 0
    %2009 = vmatpush1.bf16.msra.mxu0 %v1986
    %2010 = vmatprep.subr.bf16.mxu0 0
    %2011 = vmatpush1.bf16.msra.mxu0 %v1987
    %2012 = vmatprep.subr.bf16.mxu0 0
    %2013 = vmatpush1.bf16.msra.mxu0 0
    %2014 = vmatprep.subr.bf16.mxu0 0
    %2015 = vmatpush1.bf16.msra.mxu0 0
    %2016 = vmatprep.subr.bf16.mxu0 0
    %2017 = vmatpush1.bf16.msra.mxu0 0
    %2018 = vmatprep.subr.bf16.mxu0 0
    %2019 = vmatpush1.bf16.msra.mxu0 0
    %2020 = vmatprep.subr.bf16.mxu0 0
    %2021 = vmatpush1.bf16.msra.mxu0 0
    %2022 = vmatprep.subr.bf16.mxu0 0
    %2023 = vmatpush1.bf16.msra.mxu0 0
    %2024 = vmatprep.subr.bf16.mxu0 0
    %2025 = vmatpush1.bf16.msra.mxu0 0
    %2026 = vmatprep.subr.bf16.mxu0 0
    %2027 = vmatpush1.bf16.msra.mxu0 0
    %2028 = vmatprep.mubr.bf16.mxu0 0
    %2029 = vmatmul.mubr.bf16.gmra.mrb[0].mxu0 %v1924
    %v2030 = vpop.f32.mrb[0].mxu0
    %v2031 = vadd.f32 %v1946, %v2030
    %v2032 = vpop.f32.mrb[0].mxu0
    %v2033 = vpop.f32.mrb[0].mxu0
    %v2034 = vpop.f32.mrb[0].mxu0
    %2035 = vdwg.mxu0
    %v2036 = vlaneseq
    %v2037 = vand.u32 %v2036, 127
    %vm2038 = vcmp.lt.s32.totalorder %v2037, 10
    %v2039 = vsel %vm2038, %v2031, -1e+30
    %2040 = vmax.xlane.f32.xlu0 %v2039
    %v2041 = vpop.xlane.xlu0 %2040
    %v2042 = vsub.f32 %v2039, %v2041
    %v2043 = vmul.f32 %v2042, 1.442695
    %v2044 = vpow.pop %v2043
    %2045 = vadd.xlane.f32.xlu0 %v2044
    %v2046 = vpop.xlane.xlu0 %2045
    %v2047 = vrcp.pop %v2046
    %v2048 = vmul.f32 %v2044, %v2047
    %2049 = vst [vmem:[#allocation2] sm:$0xff] %v2048
    // Predicated region
    $region30: #{mnist_flat_forward.1} parent=1 // pred_check
      _
    $region31: #{mnist_flat_forward.1} parent=1 // pred_check_branch
      %2051 = sbr.rel (0) target = $region33
    $region32: #{mnist_flat_forward.1} parent=1 // pred_region
      %s2053 = ssub.s32 128, 128
      %2054 = vsyncadd [#allocation3], %s2053
      %s2056 = sshll.u32 [#allocation2], 4
      %s2057 = int_to_ptr.vmem [resolvable:$true] %s2056
      %2059 = dma.vmem_to_hbm [thread:$0]  %s2057, 128, %s7, [#allocation3]
    $region33: #{mnist_flat_forward.1} parent=1 // pred_fallthru
      _
    // Predicated region
    $region34: #{mnist_flat_forward.1} parent=1 // pred_check
      _
    $region35: #{mnist_flat_forward.1} parent=1 // pred_check_branch
      %2061 = sbr.rel (0) target = $region37
    $region36: #{mnist_flat_forward.1} parent=1 // pred_region
      %2062 = dma.done [#allocation3], 128
    $region37: #{mnist_flat_forward.1} parent=1 // pred_fallthru
      _
    %2063 = vsyncpa [#allocation3], 1

</llo_original>
